<compile_context>
chip_gen: v6e
topology: v6e:2x2x1
jax: 0.10.0
libtpu: 0.0.40
codegen_flags: <defaults>
</compile_context>

<pallas_src>
import functools
import math

import numpy as np
import jax
import jax.numpy as jnp
from jax import lax
from jax.experimental import pallas as pl
from jax.experimental.pallas import tpu as pltpu


def _cross_attn_block_kernel(seq_ref, cond_ref,
                             wq_ref, bq_ref, wkv_ref, bkv_ref,
                             wo_ref, bo_ref, gamma_ref, beta_ref,
                             out_ref, y_ref, *, num_heads, embed_dim):
    # One grid step == one batch element; everything fits in VMEM at these sizes.
    x = seq_ref[0]                                   # (S, D) f32  (queries)
    c = cond_ref[0]                                  # (T, D) f32  (keys/values)
    D = embed_dim
    H = num_heads
    Dh = D // H

    # NOTE: PyTorch module scales by sqrt(embed_dim), NOT sqrt(head_dim).
    scale = 1.0 / math.sqrt(D)

    # Query projection (one wide matmul); scale folded into q (cheaper than
    # scaling every (S, T) score matrix).
    q = jnp.dot(x, wq_ref[...], preferred_element_type=jnp.float32) + bq_ref[...]
    q = q * scale

    # Fused K|V projection on cond: one (T, D) x (D, 2D) matmul.
    kv = jnp.dot(c, wkv_ref[...], preferred_element_type=jnp.float32) + bkv_ref[...]

    # Per-head attention. H is small and statically unrolled; no k.T, no concat.
    for h in range(H):
        qh = q[:, h * Dh:(h + 1) * Dh]               # (S, Dh)
        kh = kv[:, h * Dh:(h + 1) * Dh]              # (T, Dh)
        vh = kv[:, D + h * Dh:D + (h + 1) * Dh]      # (T, Dh)

        # qh @ kh^T without an explicit transpose (contract dim 1 of both).
        s = lax.dot_general(qh, kh, (((1,), (1,)), ((), ())),
                            preferred_element_type=jnp.float32)   # (S, T)
        s = s - jnp.max(s, axis=-1, keepdims=True)   # numerically-stable softmax
        p = jnp.exp(s)
        # TODO(synk): pl.reciprocal(approx=True) would use the idle EUP slot but
        # can exceed the 1e-5 check tolerance; kept exact here.
        p = p * pl.reciprocal(jnp.sum(p, axis=-1, keepdims=True), approx=False)
        # TODO(synk): attention dropout omitted (module in eval/inference mode).

        # Write this head's PV result straight into its column slot (no concat).
        y_ref[:, h * Dh:(h + 1) * Dh] = jnp.dot(p, vh,
                                                preferred_element_type=jnp.float32)

    # Output head projection (one wide matmul) + residual + LayerNorm (eps=1e-5).
    attn = jnp.dot(y_ref[...], wo_ref[...],
                   preferred_element_type=jnp.float32) + bo_ref[...]
    # TODO(synk): residual-path dropout omitted (eval mode identity).
    res = x + attn
    mean = jnp.mean(res, axis=-1, keepdims=True)
    var = jnp.mean((res - mean) ** 2, axis=-1, keepdims=True)
    normed = (res - mean) * lax.rsqrt(var + 1e-5)
    out_ref[0] = normed * gamma_ref[...] + beta_ref[...]


def cross_attention_block(seq, cond, params, *, num_heads):
    """seq: (N, S, D) f32 queries, cond: (N, T, D) f32 keys/values -> (N, S, D)."""
    N, S, D = seq.shape
    _, T, _ = cond.shape
    wq, bq, wk, bk, wv, bv, wo, bo, gamma, beta = params

    # Fuse K and V projection weights host-side -> single in-kernel matmul.
    wkv = jnp.concatenate([wk, wv], axis=1)          # (D, 2D)
    bkv = jnp.concatenate([bk, bv], axis=1)          # (1, 2D)

    kernel = functools.partial(_cross_attn_block_kernel,
                               num_heads=num_heads, embed_dim=D)
    const = lambda shape: pl.BlockSpec(shape, lambda n: (0, 0))

    return pl.pallas_call(
        kernel,
        out_shape=jax.ShapeDtypeStruct((N, S, D), jnp.float32),
        grid_spec=pltpu.PrefetchScalarGridSpec(
            num_scalar_prefetch=0,
            grid=(N,),
            in_specs=[
                pl.BlockSpec((1, S, D), lambda n: (n, 0, 0)),   # seq  (per-batch tile)
                pl.BlockSpec((1, T, D), lambda n: (n, 0, 0)),   # cond (per-batch tile)
                const((D, D)), const((1, D)),                   # Wq, bq
                const((D, 2 * D)), const((1, 2 * D)),           # Wkv, bkv (fused)
                const((D, D)), const((1, D)),                   # Wo, bo
                const((1, D)), const((1, D)),                   # gamma, beta
            ],
            out_specs=pl.BlockSpec((1, S, D), lambda n: (n, 0, 0)),
            scratch_shapes=[pltpu.VMEM((S, D), jnp.float32)],   # head-output accumulator
        ),
        compiler_params=pltpu.CompilerParams(
            dimension_semantics=("parallel",),
            vmem_limit_bytes=32 * 1024 * 1024,
        ),
    )(seq, cond, wq, bq, wkv, bkv, wo, bo, gamma, beta)


def _reference(seq, cond, params, num_heads):
    """Pure-JAX reference mirroring the PyTorch CrossAttentionBlock (eval mode)."""
    wq, bq, wk, bk, wv, bv, wo, bo, gamma, beta = params
    N, S, D = seq.shape
    _, T, _ = cond.shape
    H = num_heads
    Dh = D // H
    q = (seq @ wq + bq).reshape(N, S, H, Dh).transpose(0, 2, 1, 3)
    k = (cond @ wk + bk).reshape(N, T, H, Dh).transpose(0, 2, 1, 3)
    v = (cond @ wv + bv).reshape(N, T, H, Dh).transpose(0, 2, 1, 3)
    dot = jnp.einsum('nhsd,nhtd->nhst', q, k) / np.sqrt(D)
    p = jax.nn.softmax(dot, axis=-1)
    y = jnp.einsum('nhst,nhtd->nhsd', p, v).transpose(0, 2, 1, 3).reshape(N, S, D)
    out = y @ wo + bo
    res = seq + out
    mean = res.mean(-1, keepdims=True)
    var = ((res - mean) ** 2).mean(-1, keepdims=True)
    return (res - mean) / jnp.sqrt(var + 1e-5) * gamma + beta


if __name__ == "__main__":
    N, S, T, D, H = 2, 8, 16, 32, 4
    key = jax.random.PRNGKey(0)
    ks = jax.random.split(key, 10)

    seq = jax.random.normal(ks[0], (N, S, D), dtype=jnp.float32)
    cond = jax.random.normal(ks[1], (N, T, D), dtype=jnp.float32)

    def lin_init(kw, kb, fan_in, fan_out):
        bound = 1.0 / math.sqrt(fan_in)
        w = jax.random.uniform(kw, (fan_in, fan_out), jnp.float32, -bound, bound)
        b = jax.random.uniform(kb, (1, fan_out), jnp.float32, -bound, bound)
        return w, b

    wq, bq = lin_init(ks[2], ks[3], D, D)
    wk, bk = lin_init(ks[4], ks[5], D, D)
    wv, bv = lin_init(ks[6], ks[7], D, D)
    wo, bo = lin_init(ks[8], ks[9], D, D)
    gamma = jnp.ones((1, D), jnp.float32)
    beta = jnp.zeros((1, D), jnp.float32)
    params = (wq, bq, wk, bk, wv, bv, wo, bo, gamma, beta)

    out = cross_attention_block(seq, cond, params, num_heads=H)
    out = jax.block_until_ready(out)

    ref = _reference(seq, cond, params, H)
    np.testing.assert_allclose(np.asarray(out), np.asarray(ref), rtol=1e-5, atol=1e-5)

    print("KERNEL_OK")
</pallas_src>

<mosaic_0001>
module attributes {stable_mosaic.version = 11 : i64} {
  func.func @_cross_attn_block_kernel(%arg0: i32, %arg1: memref<1x8x32xf32, #tpu.memory_space<vmem>>, %arg2: memref<1x16x32xf32, #tpu.memory_space<vmem>>, %arg3: memref<32x32xf32, #tpu.memory_space<vmem>>, %arg4: memref<1x32xf32, #tpu.memory_space<vmem>>, %arg5: memref<32x64xf32, #tpu.memory_space<vmem>>, %arg6: memref<1x64xf32, #tpu.memory_space<vmem>>, %arg7: memref<32x32xf32, #tpu.memory_space<vmem>>, %arg8: memref<1x32xf32, #tpu.memory_space<vmem>>, %arg9: memref<1x32xf32, #tpu.memory_space<vmem>>, %arg10: memref<1x32xf32, #tpu.memory_space<vmem>>, %arg11: memref<1x8x32xf32, #tpu.memory_space<vmem>>, %arg12: memref<8x32xf32, #tpu.memory_space<vmem>>) attributes {dimension_semantics = [#tpu.dimension_semantics<parallel>], iteration_bounds = array<i64: 2>, scalar_prefetch = 0 : i64, scratch_operands = 1 : i64, tpu.core_type = #tpu.core_type<tc>, window_params = [{transform_indices = @transform_0, window_bounds = array<i64: 1, 8, 32>}, {transform_indices = @transform_1, window_bounds = array<i64: 1, 16, 32>}, {pipeline_mode = #tpu.pipeline_mode<synchronous>, transform_indices = @transform_2, window_bounds = array<i64: 32, 32>}, {pipeline_mode = #tpu.pipeline_mode<synchronous>, transform_indices = @transform_3, window_bounds = array<i64: 1, 32>}, {pipeline_mode = #tpu.pipeline_mode<synchronous>, transform_indices = @transform_4, window_bounds = array<i64: 32, 64>}, {pipeline_mode = #tpu.pipeline_mode<synchronous>, transform_indices = @transform_5, window_bounds = array<i64: 1, 64>}, {pipeline_mode = #tpu.pipeline_mode<synchronous>, transform_indices = @transform_6, window_bounds = array<i64: 32, 32>}, {pipeline_mode = #tpu.pipeline_mode<synchronous>, transform_indices = @transform_7, window_bounds = array<i64: 1, 32>}, {pipeline_mode = #tpu.pipeline_mode<synchronous>, transform_indices = @transform_8, window_bounds = array<i64: 1, 32>}, {pipeline_mode = #tpu.pipeline_mode<synchronous>, transform_indices = @transform_9, window_bounds = array<i64: 1, 32>}, {transform_indices = @transform_10, window_bounds = array<i64: 1, 8, 32>}]} {
    %c0 = arith.constant 0 : index
    %c0_0 = arith.constant 0 : index
    %c0_1 = arith.constant 0 : index
    %0 = vector.load %arg1[%c0, %c0_0, %c0_1] : memref<1x8x32xf32, #tpu.memory_space<vmem>>, vector<1x8x32xf32>
    %1 = vector.shape_cast %0 : vector<1x8x32xf32> to vector<8x32xf32>
    %c0_2 = arith.constant 0 : index
    %c0_3 = arith.constant 0 : index
    %c0_4 = arith.constant 0 : index
    %2 = vector.load %arg2[%c0_2, %c0_3, %c0_4] : memref<1x16x32xf32, #tpu.memory_space<vmem>>, vector<1x16x32xf32>
    %3 = vector.shape_cast %2 : vector<1x16x32xf32> to vector<16x32xf32>
    %c0_5 = arith.constant 0 : index
    %c0_6 = arith.constant 0 : index
    %4 = vector.load %arg3[%c0_5, %c0_6] : memref<32x32xf32, #tpu.memory_space<vmem>>, vector<32x32xf32>
    %cst = arith.constant dense<0.000000e+00> : vector<8x32xf32>
    %5 = tpu.matmul %1, %4, %cst {dimension_numbers = #tpu.dot_dimension_numbers<[1], [0], [0], [1], [0, 0, 1, 1], [], []>} : vector<8x32xf32>, vector<32x32xf32>, vector<8x32xf32> -> vector<8x32xf32>
    %c0_7 = arith.constant 0 : index
    %c0_8 = arith.constant 0 : index
    %6 = vector.load %arg4[%c0_7, %c0_8] : memref<1x32xf32, #tpu.memory_space<vmem>>, vector<1x32xf32>
    %7 = vector.broadcast %6 : vector<1x32xf32> to vector<8x32xf32>
    %8 = arith.addf %5, %7 : vector<8x32xf32>
    %cst_9 = arith.constant 0.176776692 : f32
    %9 = vector.broadcast %cst_9 : f32 to vector<8x32xf32>
    %10 = arith.mulf %8, %9 : vector<8x32xf32>
    %c0_10 = arith.constant 0 : index
    %c0_11 = arith.constant 0 : index
    %11 = vector.load %arg5[%c0_10, %c0_11] : memref<32x64xf32, #tpu.memory_space<vmem>>, vector<32x64xf32>
    %cst_12 = arith.constant dense<0.000000e+00> : vector<16x64xf32>
    %12 = tpu.matmul %3, %11, %cst_12 {dimension_numbers = #tpu.dot_dimension_numbers<[1], [0], [0], [1], [0, 0, 1, 1], [], []>} : vector<16x32xf32>, vector<32x64xf32>, vector<16x64xf32> -> vector<16x64xf32>
    %c0_13 = arith.constant 0 : index
    %c0_14 = arith.constant 0 : index
    %13 = vector.load %arg6[%c0_13, %c0_14] : memref<1x64xf32, #tpu.memory_space<vmem>>, vector<1x64xf32>
    %14 = vector.broadcast %13 : vector<1x64xf32> to vector<16x64xf32>
    %15 = arith.addf %12, %14 : vector<16x64xf32>
    %16 = vector.extract_strided_slice %10 {offsets = [0, 0], sizes = [8, 8], strides = [1, 1]} : vector<8x32xf32> to vector<8x8xf32>
    %17 = vector.extract_strided_slice %15 {offsets = [0, 0], sizes = [16, 8], strides = [1, 1]} : vector<16x64xf32> to vector<16x8xf32>
    %18 = vector.extract_strided_slice %15 {offsets = [0, 32], sizes = [16, 8], strides = [1, 1]} : vector<16x64xf32> to vector<16x8xf32>
    %cst_15 = arith.constant dense<0.000000e+00> : vector<8x16xf32>
    %19 = tpu.matmul %16, %17, %cst_15 {dimension_numbers = #tpu.dot_dimension_numbers<[1], [1], [0], [0], [0, 0, 1, 0], [], []>} : vector<8x8xf32>, vector<16x8xf32>, vector<8x16xf32> -> vector<8x16xf32>
    %cst_16 = arith.constant dense<0xFF800000> : vector<8xf32>
    %20 = vector.multi_reduction <maximumf>, %19, %cst_16 [1] : vector<8x16xf32> to vector<8xf32>
    %21 = vector.shape_cast %20 : vector<8xf32> to vector<8x1xf32>
    %22 = vector.broadcast %21 : vector<8x1xf32> to vector<8x16xf32>
    %23 = arith.subf %19, %22 : vector<8x16xf32>
    %24 = math.exp %23 : vector<8x16xf32>
    %cst_17 = arith.constant dense<0.000000e+00> : vector<8xf32>
    %25 = vector.multi_reduction <add>, %24, %cst_17 [1] : vector<8x16xf32> to vector<8xf32>
    %26 = vector.shape_cast %25 : vector<8xf32> to vector<8x1xf32>
    %27 = tpu.reciprocal %26 : vector<8x1xf32> -> vector<8x1xf32>
    %28 = vector.broadcast %27 : vector<8x1xf32> to vector<8x16xf32>
    %29 = arith.mulf %24, %28 : vector<8x16xf32>
    %cst_18 = arith.constant dense<0.000000e+00> : vector<8x8xf32>
    %30 = tpu.matmul %29, %18, %cst_18 {dimension_numbers = #tpu.dot_dimension_numbers<[1], [0], [0], [1], [0, 0, 1, 1], [], []>} : vector<8x16xf32>, vector<16x8xf32>, vector<8x8xf32> -> vector<8x8xf32>
    %c0_19 = arith.constant 0 : index
    %c0_20 = arith.constant 0 : index
    %31 = vector.load %arg12[%c0_19, %c0_20] : memref<8x32xf32, #tpu.memory_space<vmem>>, vector<8x8xf32>
    tpu.vector_store %arg12[%c0_19, %c0_20], %30 {strides = array<i32>} : memref<8x32xf32, #tpu.memory_space<vmem>>, vector<8x8xf32>,
    %32 = vector.extract_strided_slice %10 {offsets = [0, 8], sizes = [8, 8], strides = [1, 1]} : vector<8x32xf32> to vector<8x8xf32>
    %33 = vector.extract_strided_slice %15 {offsets = [0, 8], sizes = [16, 8], strides = [1, 1]} : vector<16x64xf32> to vector<16x8xf32>
    %34 = vector.extract_strided_slice %15 {offsets = [0, 40], sizes = [16, 8], strides = [1, 1]} : vector<16x64xf32> to vector<16x8xf32>
    %cst_21 = arith.constant dense<0.000000e+00> : vector<8x16xf32>
    %35 = tpu.matmul %32, %33, %cst_21 {dimension_numbers = #tpu.dot_dimension_numbers<[1], [1], [0], [0], [0, 0, 1, 0], [], []>} : vector<8x8xf32>, vector<16x8xf32>, vector<8x16xf32> -> vector<8x16xf32>
    %cst_22 = arith.constant dense<0xFF800000> : vector<8xf32>
    %36 = vector.multi_reduction <maximumf>, %35, %cst_22 [1] : vector<8x16xf32> to vector<8xf32>
    %37 = vector.shape_cast %36 : vector<8xf32> to vector<8x1xf32>
    %38 = vector.broadcast %37 : vector<8x1xf32> to vector<8x16xf32>
    %39 = arith.subf %35, %38 : vector<8x16xf32>
    %40 = math.exp %39 : vector<8x16xf32>
    %cst_23 = arith.constant dense<0.000000e+00> : vector<8xf32>
    %41 = vector.multi_reduction <add>, %40, %cst_23 [1] : vector<8x16xf32> to vector<8xf32>
    %42 = vector.shape_cast %41 : vector<8xf32> to vector<8x1xf32>
    %43 = tpu.reciprocal %42 : vector<8x1xf32> -> vector<8x1xf32>
    %44 = vector.broadcast %43 : vector<8x1xf32> to vector<8x16xf32>
    %45 = arith.mulf %40, %44 : vector<8x16xf32>
    %cst_24 = arith.constant dense<0.000000e+00> : vector<8x8xf32>
    %46 = tpu.matmul %45, %34, %cst_24 {dimension_numbers = #tpu.dot_dimension_numbers<[1], [0], [0], [1], [0, 0, 1, 1], [], []>} : vector<8x16xf32>, vector<16x8xf32>, vector<8x8xf32> -> vector<8x8xf32>
    %c0_25 = arith.constant 0 : index
    %c8 = arith.constant 8 : index
    %47 = vector.load %arg12[%c0_25, %c8] : memref<8x32xf32, #tpu.memory_space<vmem>>, vector<8x8xf32>
    tpu.vector_store %arg12[%c0_25, %c8], %46 {strides = array<i32>} : memref<8x32xf32, #tpu.memory_space<vmem>>, vector<8x8xf32>,
    %48 = vector.extract_strided_slice %10 {offsets = [0, 16], sizes = [8, 8], strides = [1, 1]} : vector<8x32xf32> to vector<8x8xf32>
    %49 = vector.extract_strided_slice %15 {offsets = [0, 16], sizes = [16, 8], strides = [1, 1]} : vector<16x64xf32> to vector<16x8xf32>
    %50 = vector.extract_strided_slice %15 {offsets = [0, 48], sizes = [16, 8], strides = [1, 1]} : vector<16x64xf32> to vector<16x8xf32>
    %cst_26 = arith.constant dense<0.000000e+00> : vector<8x16xf32>
    %51 = tpu.matmul %48, %49, %cst_26 {dimension_numbers = #tpu.dot_dimension_numbers<[1], [1], [0], [0], [0, 0, 1, 0], [], []>} : vector<8x8xf32>, vector<16x8xf32>, vector<8x16xf32> -> vector<8x16xf32>
    %cst_27 = arith.constant dense<0xFF800000> : vector<8xf32>
    %52 = vector.multi_reduction <maximumf>, %51, %cst_27 [1] : vector<8x16xf32> to vector<8xf32>
    %53 = vector.shape_cast %52 : vector<8xf32> to vector<8x1xf32>
    %54 = vector.broadcast %53 : vector<8x1xf32> to vector<8x16xf32>
    %55 = arith.subf %51, %54 : vector<8x16xf32>
    %56 = math.exp %55 : vector<8x16xf32>
    %cst_28 = arith.constant dense<0.000000e+00> : vector<8xf32>
    %57 = vector.multi_reduction <add>, %56, %cst_28 [1] : vector<8x16xf32> to vector<8xf32>
    %58 = vector.shape_cast %57 : vector<8xf32> to vector<8x1xf32>
    %59 = tpu.reciprocal %58 : vector<8x1xf32> -> vector<8x1xf32>
    %60 = vector.broadcast %59 : vector<8x1xf32> to vector<8x16xf32>
    %61 = arith.mulf %56, %60 : vector<8x16xf32>
    %cst_29 = arith.constant dense<0.000000e+00> : vector<8x8xf32>
    %62 = tpu.matmul %61, %50, %cst_29 {dimension_numbers = #tpu.dot_dimension_numbers<[1], [0], [0], [1], [0, 0, 1, 1], [], []>} : vector<8x16xf32>, vector<16x8xf32>, vector<8x8xf32> -> vector<8x8xf32>
    %c0_30 = arith.constant 0 : index
    %c16 = arith.constant 16 : index
    %63 = vector.load %arg12[%c0_30, %c16] : memref<8x32xf32, #tpu.memory_space<vmem>>, vector<8x8xf32>
    tpu.vector_store %arg12[%c0_30, %c16], %62 {strides = array<i32>} : memref<8x32xf32, #tpu.memory_space<vmem>>, vector<8x8xf32>,
    %64 = vector.extract_strided_slice %10 {offsets = [0, 24], sizes = [8, 8], strides = [1, 1]} : vector<8x32xf32> to vector<8x8xf32>
    %65 = vector.extract_strided_slice %15 {offsets = [0, 24], sizes = [16, 8], strides = [1, 1]} : vector<16x64xf32> to vector<16x8xf32>
    %66 = vector.extract_strided_slice %15 {offsets = [0, 56], sizes = [16, 8], strides = [1, 1]} : vector<16x64xf32> to vector<16x8xf32>
    %cst_31 = arith.constant dense<0.000000e+00> : vector<8x16xf32>
    %67 = tpu.matmul %64, %65, %cst_31 {dimension_numbers = #tpu.dot_dimension_numbers<[1], [1], [0], [0], [0, 0, 1, 0], [], []>} : vector<8x8xf32>, vector<16x8xf32>, vector<8x16xf32> -> vector<8x16xf32>
    %cst_32 = arith.constant dense<0xFF800000> : vector<8xf32>
    %68 = vector.multi_reduction <maximumf>, %67, %cst_32 [1] : vector<8x16xf32> to vector<8xf32>
    %69 = vector.shape_cast %68 : vector<8xf32> to vector<8x1xf32>
    %70 = vector.broadcast %69 : vector<8x1xf32> to vector<8x16xf32>
    %71 = arith.subf %67, %70 : vector<8x16xf32>
    %72 = math.exp %71 : vector<8x16xf32>
    %cst_33 = arith.constant dense<0.000000e+00> : vector<8xf32>
    %73 = vector.multi_reduction <add>, %72, %cst_33 [1] : vector<8x16xf32> to vector<8xf32>
    %74 = vector.shape_cast %73 : vector<8xf32> to vector<8x1xf32>
    %75 = tpu.reciprocal %74 : vector<8x1xf32> -> vector<8x1xf32>
    %76 = vector.broadcast %75 : vector<8x1xf32> to vector<8x16xf32>
    %77 = arith.mulf %72, %76 : vector<8x16xf32>
    %cst_34 = arith.constant dense<0.000000e+00> : vector<8x8xf32>
    %78 = tpu.matmul %77, %66, %cst_34 {dimension_numbers = #tpu.dot_dimension_numbers<[1], [0], [0], [1], [0, 0, 1, 1], [], []>} : vector<8x16xf32>, vector<16x8xf32>, vector<8x8xf32> -> vector<8x8xf32>
    %c0_35 = arith.constant 0 : index
    %c24 = arith.constant 24 : index
    %79 = vector.load %arg12[%c0_35, %c24] : memref<8x32xf32, #tpu.memory_space<vmem>>, vector<8x8xf32>
    tpu.vector_store %arg12[%c0_35, %c24], %78 {strides = array<i32>} : memref<8x32xf32, #tpu.memory_space<vmem>>, vector<8x8xf32>,
    %c0_36 = arith.constant 0 : index
    %c0_37 = arith.constant 0 : index
    %80 = vector.load %arg12[%c0_36, %c0_37] : memref<8x32xf32, #tpu.memory_space<vmem>>, vector<8x32xf32>
    %c0_38 = arith.constant 0 : index
    %c0_39 = arith.constant 0 : index
    %81 = vector.load %arg7[%c0_38, %c0_39] : memref<32x32xf32, #tpu.memory_space<vmem>>, vector<32x32xf32>
    %cst_40 = arith.constant dense<0.000000e+00> : vector<8x32xf32>
    %82 = tpu.matmul %80, %81, %cst_40 {dimension_numbers = #tpu.dot_dimension_numbers<[1], [0], [0], [1], [0, 0, 1, 1], [], []>} : vector<8x32xf32>, vector<32x32xf32>, vector<8x32xf32> -> vector<8x32xf32>
    %c0_41 = arith.constant 0 : index
    %c0_42 = arith.constant 0 : index
    %83 = vector.load %arg8[%c0_41, %c0_42] : memref<1x32xf32, #tpu.memory_space<vmem>>, vector<1x32xf32>
    %84 = vector.broadcast %83 : vector<1x32xf32> to vector<8x32xf32>
    %85 = arith.addf %82, %84 : vector<8x32xf32>
    %86 = arith.addf %1, %85 : vector<8x32xf32>
    %cst_43 = arith.constant dense<0.000000e+00> : vector<8xf32>
    %87 = vector.multi_reduction <add>, %86, %cst_43 [1] : vector<8x32xf32> to vector<8xf32>
    %88 = vector.shape_cast %87 : vector<8xf32> to vector<8x1xf32>
    %cst_44 = arith.constant 3.200000e+01 : f32
    %89 = vector.broadcast %cst_44 : f32 to vector<8x1xf32>
    %90 = arith.divf %88, %89 : vector<8x1xf32>
    %91 = vector.broadcast %90 : vector<8x1xf32> to vector<8x32xf32>
    %92 = arith.subf %86, %91 : vector<8x32xf32>
    %93 = arith.mulf %92, %92 : vector<8x32xf32>
    %cst_45 = arith.constant dense<0.000000e+00> : vector<8xf32>
    %94 = vector.multi_reduction <add>, %93, %cst_45 [1] : vector<8x32xf32> to vector<8xf32>
    %95 = vector.shape_cast %94 : vector<8xf32> to vector<8x1xf32>
    %cst_46 = arith.constant 3.200000e+01 : f32
    %96 = vector.broadcast %cst_46 : f32 to vector<8x1xf32>
    %97 = arith.divf %95, %96 : vector<8x1xf32>
    %98 = vector.broadcast %90 : vector<8x1xf32> to vector<8x32xf32>
    %99 = arith.subf %86, %98 : vector<8x32xf32>
    %cst_47 = arith.constant 9.99999974E-6 : f32
    %100 = vector.broadcast %cst_47 : f32 to vector<8x1xf32>
    %101 = arith.addf %97, %100 : vector<8x1xf32>
    %102 = math.rsqrt %101 : vector<8x1xf32>
    %103 = vector.broadcast %102 : vector<8x1xf32> to vector<8x32xf32>
    %104 = arith.mulf %99, %103 : vector<8x32xf32>
    %c0_48 = arith.constant 0 : index
    %c0_49 = arith.constant 0 : index
    %105 = vector.load %arg9[%c0_48, %c0_49] : memref<1x32xf32, #tpu.memory_space<vmem>>, vector<1x32xf32>
    %106 = vector.broadcast %105 : vector<1x32xf32> to vector<8x32xf32>
    %107 = arith.mulf %104, %106 : vector<8x32xf32>
    %c0_50 = arith.constant 0 : index
    %c0_51 = arith.constant 0 : index
    %108 = vector.load %arg10[%c0_50, %c0_51] : memref<1x32xf32, #tpu.memory_space<vmem>>, vector<1x32xf32>
    %109 = vector.broadcast %108 : vector<1x32xf32> to vector<8x32xf32>
    %110 = arith.addf %107, %109 : vector<8x32xf32>
    %c0_52 = arith.constant 0 : index
    %c0_53 = arith.constant 0 : index
    %c0_54 = arith.constant 0 : index
    %111 = vector.load %arg11[%c0_52, %c0_53, %c0_54] : memref<1x8x32xf32, #tpu.memory_space<vmem>>, vector<1x8x32xf32>
    %112 = vector.shape_cast %111 : vector<1x8x32xf32> to vector<8x32xf32>
    %113 = vector.shape_cast %110 : vector<8x32xf32> to vector<1x8x32xf32>
    tpu.vector_store %arg11[%c0_52, %c0_53, %c0_54], %113 {strides = array<i32>} : memref<1x8x32xf32, #tpu.memory_space<vmem>>, vector<1x8x32xf32>,
    return
  }
  func.func @transform_0(%arg0: i32) -> (i32, i32, i32) {
    %c0_i32 = arith.constant 0 : i32
    %c0_i32_0 = arith.constant 0 : i32
    %c0_i32_1 = arith.constant 0 : i32
    return %arg0, %c0_i32, %c0_i32_0 : i32, i32, i32
  }
  func.func @transform_1(%arg0: i32) -> (i32, i32, i32) {
    %c0_i32 = arith.constant 0 : i32
    %c0_i32_0 = arith.constant 0 : i32
    %c0_i32_1 = arith.constant 0 : i32
    return %arg0, %c0_i32, %c0_i32_0 : i32, i32, i32
  }
  func.func @transform_2(%arg0: i32) -> (i32, i32) {
    %c0_i32 = arith.constant 0 : i32
    %c0_i32_0 = arith.constant 0 : i32
    %c0_i32_1 = arith.constant 0 : i32
    return %c0_i32, %c0_i32_0 : i32, i32
  }
  func.func @transform_3(%arg0: i32) -> (i32, i32) {
    %c0_i32 = arith.constant 0 : i32
    %c0_i32_0 = arith.constant 0 : i32
    %c0_i32_1 = arith.constant 0 : i32
    return %c0_i32, %c0_i32_0 : i32, i32
  }
  func.func @transform_4(%arg0: i32) -> (i32, i32) {
    %c0_i32 = arith.constant 0 : i32
    %c0_i32_0 = arith.constant 0 : i32
    %c0_i32_1 = arith.constant 0 : i32
    return %c0_i32, %c0_i32_0 : i32, i32
  }
  func.func @transform_5(%arg0: i32) -> (i32, i32) {
    %c0_i32 = arith.constant 0 : i32
    %c0_i32_0 = arith.constant 0 : i32
    %c0_i32_1 = arith.constant 0 : i32
    return %c0_i32, %c0_i32_0 : i32, i32
  }
  func.func @transform_6(%arg0: i32) -> (i32, i32) {
    %c0_i32 = arith.constant 0 : i32
    %c0_i32_0 = arith.constant 0 : i32
    %c0_i32_1 = arith.constant 0 : i32
    return %c0_i32, %c0_i32_0 : i32, i32
  }
  func.func @transform_7(%arg0: i32) -> (i32, i32) {
    %c0_i32 = arith.constant 0 : i32
    %c0_i32_0 = arith.constant 0 : i32
    %c0_i32_1 = arith.constant 0 : i32
    return %c0_i32, %c0_i32_0 : i32, i32
  }
  func.func @transform_8(%arg0: i32) -> (i32, i32) {
    %c0_i32 = arith.constant 0 : i32
    %c0_i32_0 = arith.constant 0 : i32
    %c0_i32_1 = arith.constant 0 : i32
    return %c0_i32, %c0_i32_0 : i32, i32
  }
  func.func @transform_9(%arg0: i32) -> (i32, i32) {
    %c0_i32 = arith.constant 0 : i32
    %c0_i32_0 = arith.constant 0 : i32
    %c0_i32_1 = arith.constant 0 : i32
    return %c0_i32, %c0_i32_0 : i32, i32
  }
  func.func @transform_10(%arg0: i32) -> (i32, i32, i32) {
    %c0_i32 = arith.constant 0 : i32
    %c0_i32_0 = arith.constant 0 : i32
    %c0_i32_1 = arith.constant 0 : i32
    return %arg0, %c0_i32, %c0_i32_0 : i32, i32, i32
  }
}

</mosaic_0001>

<llo_original>
// kernel: tpu_custom_call.1
$region0: #{tpu_custom_call.1}
  #allocation0 [shape = 'u32[]', space=smem, size = 0x4, offset = 0x4, fixed_abs, tag = 'smem constant byte address 0x4 - core index']
  #allocation1 [shape = 'u32[144,128]{1,0:T(1,128)}', space=vmem, size = 0x12000, scoped, tag = 'internal scratch']
  #allocation2 [shape = 'f32[8,32]{1,0:T(8,128)}', space=vmem, size = 0x1000, scoped, tag = 'scratch operand']
  %s0 = inlined_call_operand.hbm [shape: f32[2,8,32], index: 0, kind: input, shape index: {}]
  %s1 = inlined_call_operand.hbm [shape: f32[2,16,32], index: 1, kind: input, shape index: {}]
  %s2 = inlined_call_operand.hbm [shape: f32[32,32], index: 2, kind: input, shape index: {}]
  %s3 = inlined_call_operand.vmem [shape: f32[1,32], index: 3, kind: input, shape index: {}]
  %s4 = inlined_call_operand.hbm [shape: f32[32,64], index: 4, kind: input, shape index: {}]
  %s5 = inlined_call_operand.vmem [shape: f32[1,64], index: 5, kind: input, shape index: {}]
  %s6 = inlined_call_operand.hbm [shape: f32[32,32], index: 6, kind: input, shape index: {}]
  %s7 = inlined_call_operand.vmem [shape: f32[1,32], index: 7, kind: input, shape index: {}]
  %s8 = inlined_call_operand.vmem [shape: f32[1,32], index: 8, kind: input, shape index: {}]
  %s9 = inlined_call_operand.vmem [shape: f32[1,32], index: 9, kind: input, shape index: {}]
  %s10 = inlined_call_operand.hbm [shape: f32[2,8,32], index: 10, kind: output, shape index: {}]
  %s11 = sld [smem:[#allocation0]]
  $region93: #{tpu_custom_call.1} parent=0
    _
  %s13 = ssub.s32 1, %s11
  %s14 = scalar_select 0, %s13, %s11
  $region1: #{tpu_custom_call.1} parent=0
    #allocation3 [shape = 'u8[8192]{0}', space=vmem, size = 0x2000, scoped, tag = 'input window, operand 0']
    #allocation4 [shape = 's32[2]{0}', space=sflag, size = 0x8, scoped, tag = 'scoped memory for tpu_custom_call.1']
    #allocation5 [shape = 's32[2]{0}', space=sflag, size = 0x8, scoped, tag = 'scoped memory for tpu_custom_call.1']
    #allocation6 [shape = 'u8[16384]{0}', space=vmem, size = 0x4000, scoped, tag = 'input window, operand 1']
    #allocation7 [shape = 's32[2]{0}', space=sflag, size = 0x8, scoped, tag = 'scoped memory for tpu_custom_call.1']
    #allocation8 [shape = 'u8[16384]{0}', space=vmem, size = 0x4000, scoped, tag = 'input window, operand 2, single buffered']
    #allocation9 [shape = 'u8[16384]{0}', space=vmem, size = 0x4000, scoped, tag = 'input window, operand 4, single buffered']
    #allocation10 [shape = 's32[1]{0}', space=sflag, size = 0x4, scoped, tag = 'scoped memory for tpu_custom_call.1']
    #allocation11 [shape = 'u8[16384]{0}', space=vmem, size = 0x4000, scoped, tag = 'input window, operand 6, single buffered']
    #allocation12 [shape = 'u8[8192]{0}', space=vmem, size = 0x2000, scoped, tag = 'output window, operand 0']
    %15 = vsyncpa [#allocation4], 0
    %s16 = scalar_lea.sflag [#allocation4], 1
    %17 = vsyncpa %s16, 0
    %18 = vsyncpa [#allocation7], 0
    %s19 = scalar_lea.sflag [#allocation7], 1
    %20 = vsyncpa %s19, 0
    %21 = vsyncpa [#allocation10], 0
    %22 = vsyncpa [#allocation5], 0
    %s23 = scalar_lea.sflag [#allocation5], 1
    %24 = vsyncpa %s23, 0
    loop: start=0, step=1, limit=4
    $region2: #{tpu_custom_call.1} parent=1 // loop_pre_header
      _
    $region3: #{tpu_custom_call.1} parent=1 // loop_header
      %s26 = sphi 0, %s30
      %p27 = scmp.ge.s32.totalorder %s26, 4
      %s36 = sphi 0, %s38
      %s39 = sphi 0, %s36
      %s40 = sphi 0, %s39
      %s56 = sphi 0, %s40
      %s62 = sphi 0, %s64
      %s65 = sphi 0, %s62
      %s66 = sphi 0, %s65
      %s82 = sphi 0, %s66
      %s86 = sphi 0, %s86
      %s88 = sphi 0, %s86
      %s89 = sphi 0, %s88
      %s103 = sphi 0, %s89
      %s107 = sphi 0, %s107
      %s109 = sphi 0, %s107
      %s110 = sphi 0, %s109
      %s124 = sphi 0, %s110
      %s128 = sphi 0, %s128
      %s130 = sphi 0, %s128
      %s131 = sphi 0, %s130
      %s145 = sphi 0, %s131
      %s149 = sphi 0, %s149
      %s151 = sphi 0, %s149
      %s152 = sphi 0, %s151
      %s166 = sphi 0, %s152
      %s170 = sphi 0, %s170
      %s172 = sphi 0, %s170
      %s173 = sphi 0, %s172
      %s187 = sphi 0, %s173
      %s191 = sphi 0, %s191
      %s193 = sphi 0, %s191
      %s194 = sphi 0, %s193
      %s208 = sphi 0, %s194
      %s212 = sphi 0, %s212
      %s214 = sphi 0, %s212
      %s215 = sphi 0, %s214
      %s229 = sphi 0, %s215
      %s233 = sphi 0, %s233
      %s235 = sphi 0, %s233
      %s236 = sphi 0, %s235
      %s250 = sphi 0, %s236
      %s256 = sphi 0, %s258
      %s259 = sphi 0, %s256
      %s260 = sphi 0, %s259
      %s276 = sphi 0, %s260
    $region4: #{tpu_custom_call.1} parent=1 // loop_header_branch
      %29 = sbr.rel (%p27) target = $region8
    $region5: #{tpu_custom_call.1} parent=1 // loop_body
      %s31 = ssub.s32 %s26, 1
      %s32 = ssub.s32 %s26, 2
      %s33 = sadd.s32 %s26, 1
      %s34 = ssub.s32 %s26, %s33
      %p35 = scmp.eq.s32.totalorder %s34, 0
      %s37 = sadd.s32 %s36, 1
      %s38 = scalar_select %p35, %s36, %s37
      %p41 = pneg %p35
      %p42 = scmp.eq.s32.totalorder %s26, 1
      %p43 = por %p41, %p42
      %p44 = scmp.ne.s32.totalorder %s36, %s39
      %p45 = scmp.eq.s32.totalorder %s26, 0
      %p46 = por %p44, %p45
      %p47 = scmp.ne.s32.totalorder %s36, %s39
      %p48 = scmp.eq.s32.totalorder %s31, 1
      %p49 = por %p47, %p48
      %p50 = scmp.ne.s32.totalorder %s39, %s40
      %p51 = scmp.eq.s32.totalorder %s31, 0
      %p52 = por %p50, %p51
      %p53 = scmp.ne.s32.totalorder %s39, %s40
      %p54 = scmp.eq.s32.totalorder %s32, 1
      %p55 = por %p53, %p54
      %p57 = scmp.ne.s32.totalorder %s40, %s56
      %p58 = scmp.eq.s32.totalorder %s32, 0
      %p59 = por %p57, %p58
      %s60 = ssub.s32 %s26, %s33
      %p61 = scmp.eq.s32.totalorder %s60, 0
      %s63 = sadd.s32 %s62, 1
      %s64 = scalar_select %p61, %s62, %s63
      %p67 = pneg %p61
      %p68 = scmp.eq.s32.totalorder %s26, 1
      %p69 = por %p67, %p68
      %p70 = scmp.ne.s32.totalorder %s62, %s65
      %p71 = scmp.eq.s32.totalorder %s26, 0
      %p72 = por %p70, %p71
      %p73 = scmp.ne.s32.totalorder %s62, %s65
      %p74 = scmp.eq.s32.totalorder %s31, 1
      %p75 = por %p73, %p74
      %p76 = scmp.ne.s32.totalorder %s65, %s66
      %p77 = scmp.eq.s32.totalorder %s31, 0
      %p78 = por %p76, %p77
      %p79 = scmp.ne.s32.totalorder %s65, %s66
      %p80 = scmp.eq.s32.totalorder %s32, 1
      %p81 = por %p79, %p80
      %p83 = scmp.ne.s32.totalorder %s66, %s82
      %p84 = scmp.eq.s32.totalorder %s32, 0
      %p85 = por %p83, %p84
      %s87 = sadd.s32 %s86, 1
      %p90 = scmp.eq.s32.totalorder %s26, 1
      %p91 = scmp.ne.s32.totalorder %s86, %s88
      %p92 = scmp.eq.s32.totalorder %s26, 0
      %p93 = por %p91, %p92
      %p94 = scmp.ne.s32.totalorder %s86, %s88
      %p95 = scmp.eq.s32.totalorder %s31, 1
      %p96 = por %p94, %p95
      %p97 = scmp.ne.s32.totalorder %s88, %s89
      %p98 = scmp.eq.s32.totalorder %s31, 0
      %p99 = por %p97, %p98
      %p100 = scmp.ne.s32.totalorder %s88, %s89
      %p101 = scmp.eq.s32.totalorder %s32, 1
      %p102 = por %p100, %p101
      %p104 = scmp.ne.s32.totalorder %s89, %s103
      %p105 = scmp.eq.s32.totalorder %s32, 0
      %p106 = por %p104, %p105
      %s108 = sadd.s32 %s107, 1
      %p111 = scmp.eq.s32.totalorder %s26, 1
      %p112 = scmp.ne.s32.totalorder %s107, %s109
      %p113 = scmp.eq.s32.totalorder %s26, 0
      %p114 = por %p112, %p113
      %p115 = scmp.ne.s32.totalorder %s107, %s109
      %p116 = scmp.eq.s32.totalorder %s31, 1
      %p117 = por %p115, %p116
      %p118 = scmp.ne.s32.totalorder %s109, %s110
      %p119 = scmp.eq.s32.totalorder %s31, 0
      %p120 = por %p118, %p119
      %p121 = scmp.ne.s32.totalorder %s109, %s110
      %p122 = scmp.eq.s32.totalorder %s32, 1
      %p123 = por %p121, %p122
      %p125 = scmp.ne.s32.totalorder %s110, %s124
      %p126 = scmp.eq.s32.totalorder %s32, 0
      %p127 = por %p125, %p126
      %s129 = sadd.s32 %s128, 1
      %p132 = scmp.eq.s32.totalorder %s26, 1
      %p133 = scmp.ne.s32.totalorder %s128, %s130
      %p134 = scmp.eq.s32.totalorder %s26, 0
      %p135 = por %p133, %p134
      %p136 = scmp.ne.s32.totalorder %s128, %s130
      %p137 = scmp.eq.s32.totalorder %s31, 1
      %p138 = por %p136, %p137
      %p139 = scmp.ne.s32.totalorder %s130, %s131
      %p140 = scmp.eq.s32.totalorder %s31, 0
      %p141 = por %p139, %p140
      %p142 = scmp.ne.s32.totalorder %s130, %s131
      %p143 = scmp.eq.s32.totalorder %s32, 1
      %p144 = por %p142, %p143
      %p146 = scmp.ne.s32.totalorder %s131, %s145
      %p147 = scmp.eq.s32.totalorder %s32, 0
      %p148 = por %p146, %p147
      %s150 = sadd.s32 %s149, 1
      %p153 = scmp.eq.s32.totalorder %s26, 1
      %p154 = scmp.ne.s32.totalorder %s149, %s151
      %p155 = scmp.eq.s32.totalorder %s26, 0
      %p156 = por %p154, %p155
      %p157 = scmp.ne.s32.totalorder %s149, %s151
      %p158 = scmp.eq.s32.totalorder %s31, 1
      %p159 = por %p157, %p158
      %p160 = scmp.ne.s32.totalorder %s151, %s152
      %p161 = scmp.eq.s32.totalorder %s31, 0
      %p162 = por %p160, %p161
      %p163 = scmp.ne.s32.totalorder %s151, %s152
      %p164 = scmp.eq.s32.totalorder %s32, 1
      %p165 = por %p163, %p164
      %p167 = scmp.ne.s32.totalorder %s152, %s166
      %p168 = scmp.eq.s32.totalorder %s32, 0
      %p169 = por %p167, %p168
      %s171 = sadd.s32 %s170, 1
      %p174 = scmp.eq.s32.totalorder %s26, 1
      %p175 = scmp.ne.s32.totalorder %s170, %s172
      %p176 = scmp.eq.s32.totalorder %s26, 0
      %p177 = por %p175, %p176
      %p178 = scmp.ne.s32.totalorder %s170, %s172
      %p179 = scmp.eq.s32.totalorder %s31, 1
      %p180 = por %p178, %p179
      %p181 = scmp.ne.s32.totalorder %s172, %s173
      %p182 = scmp.eq.s32.totalorder %s31, 0
      %p183 = por %p181, %p182
      %p184 = scmp.ne.s32.totalorder %s172, %s173
      %p185 = scmp.eq.s32.totalorder %s32, 1
      %p186 = por %p184, %p185
      %p188 = scmp.ne.s32.totalorder %s173, %s187
      %p189 = scmp.eq.s32.totalorder %s32, 0
      %p190 = por %p188, %p189
      %s192 = sadd.s32 %s191, 1
      %p195 = scmp.eq.s32.totalorder %s26, 1
      %p196 = scmp.ne.s32.totalorder %s191, %s193
      %p197 = scmp.eq.s32.totalorder %s26, 0
      %p198 = por %p196, %p197
      %p199 = scmp.ne.s32.totalorder %s191, %s193
      %p200 = scmp.eq.s32.totalorder %s31, 1
      %p201 = por %p199, %p200
      %p202 = scmp.ne.s32.totalorder %s193, %s194
      %p203 = scmp.eq.s32.totalorder %s31, 0
      %p204 = por %p202, %p203
      %p205 = scmp.ne.s32.totalorder %s193, %s194
      %p206 = scmp.eq.s32.totalorder %s32, 1
      %p207 = por %p205, %p206
      %p209 = scmp.ne.s32.totalorder %s194, %s208
      %p210 = scmp.eq.s32.totalorder %s32, 0
      %p211 = por %p209, %p210
      %s213 = sadd.s32 %s212, 1
      %p216 = scmp.eq.s32.totalorder %s26, 1
      %p217 = scmp.ne.s32.totalorder %s212, %s214
      %p218 = scmp.eq.s32.totalorder %s26, 0
      %p219 = por %p217, %p218
      %p220 = scmp.ne.s32.totalorder %s212, %s214
      %p221 = scmp.eq.s32.totalorder %s31, 1
      %p222 = por %p220, %p221
      %p223 = scmp.ne.s32.totalorder %s214, %s215
      %p224 = scmp.eq.s32.totalorder %s31, 0
      %p225 = por %p223, %p224
      %p226 = scmp.ne.s32.totalorder %s214, %s215
      %p227 = scmp.eq.s32.totalorder %s32, 1
      %p228 = por %p226, %p227
      %p230 = scmp.ne.s32.totalorder %s215, %s229
      %p231 = scmp.eq.s32.totalorder %s32, 0
      %p232 = por %p230, %p231
      %s234 = sadd.s32 %s233, 1
      %p237 = scmp.eq.s32.totalorder %s26, 1
      %p238 = scmp.ne.s32.totalorder %s233, %s235
      %p239 = scmp.eq.s32.totalorder %s26, 0
      %p240 = por %p238, %p239
      %p241 = scmp.ne.s32.totalorder %s233, %s235
      %p242 = scmp.eq.s32.totalorder %s31, 1
      %p243 = por %p241, %p242
      %p244 = scmp.ne.s32.totalorder %s235, %s236
      %p245 = scmp.eq.s32.totalorder %s31, 0
      %p246 = por %p244, %p245
      %p247 = scmp.ne.s32.totalorder %s235, %s236
      %p248 = scmp.eq.s32.totalorder %s32, 1
      %p249 = por %p247, %p248
      %p251 = scmp.ne.s32.totalorder %s236, %s250
      %p252 = scmp.eq.s32.totalorder %s32, 0
      %p253 = por %p251, %p252
      %s254 = ssub.s32 %s26, %s33
      %p255 = scmp.eq.s32.totalorder %s254, 0
      %s257 = sadd.s32 %s256, 1
      %s258 = scalar_select %p255, %s256, %s257
      %p261 = pneg %p255
      %p262 = scmp.eq.s32.totalorder %s26, 1
      %p263 = por %p261, %p262
      %p264 = scmp.ne.s32.totalorder %s256, %s259
      %p265 = scmp.eq.s32.totalorder %s26, 0
      %p266 = por %p264, %p265
      %p267 = scmp.ne.s32.totalorder %s256, %s259
      %p268 = scmp.eq.s32.totalorder %s31, 1
      %p269 = por %p267, %p268
      %p270 = scmp.ne.s32.totalorder %s259, %s260
      %p271 = scmp.eq.s32.totalorder %s31, 0
      %p272 = por %p270, %p271
      %p273 = scmp.ne.s32.totalorder %s259, %s260
      %p274 = scmp.eq.s32.totalorder %s32, 1
      %p275 = por %p273, %p274
      %p277 = scmp.ne.s32.totalorder %s260, %s276
      %p278 = scmp.eq.s32.totalorder %s32, 0
      %p279 = por %p277, %p278
      %p280 = scmp.le.s32.totalorder 1, %s26
      %p281 = scmp.lt.s32.totalorder %s26, 3
      %p282 = pnand %p280, %p281
      %p283 = pneg %p282
      // Predicated region
      $region9: #{tpu_custom_call.1} parent=5 // pred_check
        _
      $region10: #{tpu_custom_call.1} parent=5 // pred_check_branch
        %285 = sbr.rel (%p282) target = $region12
      $region11: #{tpu_custom_call.1} parent=5 // pred_region
        %s286 = ssub.s32 %s26, 1
        // Predicated region
        $region13: #{tpu_custom_call.1} parent=11 // pred_check
          %p287 = pneg %p99
        $region14: #{tpu_custom_call.1} parent=11 // pred_check_branch
          %289 = sbr.rel (%p287) target = $region16
        $region15: #{tpu_custom_call.1} parent=11 // pred_region
          %s291 = ssub.s32 512, 512
          %292 = vsyncadd [#allocation7], %s291
          %s293 = sshll.u32 [#allocation8], 4
          %s294 = int_to_ptr.vmem [resolvable:$true] %s293
          %299 = dma.hbm_to_vmem [thread:$0]  %s2, 512, %s294, [#allocation7], 128, 128, 8
        $region16: #{tpu_custom_call.1} parent=11 // pred_fallthru
          _
        // Predicated region
        $region17: #{tpu_custom_call.1} parent=11 // pred_check
          %p300 = pneg %p120
        $region18: #{tpu_custom_call.1} parent=11 // pred_check_branch
          %302 = sbr.rel (%p300) target = $region20
        $region19: #{tpu_custom_call.1} parent=11 // pred_region
          _
        $region20: #{tpu_custom_call.1} parent=11 // pred_fallthru
          _
        // Predicated region
        $region21: #{tpu_custom_call.1} parent=11 // pred_check
          %p303 = pneg %p141
        $region22: #{tpu_custom_call.1} parent=11 // pred_check_branch
          %305 = sbr.rel (%p303) target = $region24
        $region23: #{tpu_custom_call.1} parent=11 // pred_region
          %s307 = ssub.s32 512, 512
          %308 = vsyncadd [#allocation10], %s307
          %s309 = sshll.u32 [#allocation9], 4
          %s310 = int_to_ptr.vmem [resolvable:$true] %s309
          %315 = dma.hbm_to_vmem [thread:$0]  %s4, 512, %s310, [#allocation10], 128, 128, 8
        $region24: #{tpu_custom_call.1} parent=11 // pred_fallthru
          _
        // Predicated region
        $region25: #{tpu_custom_call.1} parent=11 // pred_check
          %p316 = pneg %p162
        $region26: #{tpu_custom_call.1} parent=11 // pred_check_branch
          %318 = sbr.rel (%p316) target = $region28
        $region27: #{tpu_custom_call.1} parent=11 // pred_region
          _
        $region28: #{tpu_custom_call.1} parent=11 // pred_fallthru
          _
        // Predicated region
        $region29: #{tpu_custom_call.1} parent=11 // pred_check
          %p319 = pneg %p183
        $region30: #{tpu_custom_call.1} parent=11 // pred_check_branch
          %321 = sbr.rel (%p319) target = $region32
        $region31: #{tpu_custom_call.1} parent=11 // pred_region
          %s323 = ssub.s32 512, 512
          %324 = vsyncadd [#allocation10], %s323
          %s325 = sshll.u32 [#allocation11], 4
          %s326 = int_to_ptr.vmem [resolvable:$true] %s325
          %331 = dma.hbm_to_vmem [thread:$0]  %s6, 512, %s326, [#allocation10], 128, 128, 8
        $region32: #{tpu_custom_call.1} parent=11 // pred_fallthru
          _
        // Predicated region
        $region33: #{tpu_custom_call.1} parent=11 // pred_check
          %p332 = pneg %p204
        $region34: #{tpu_custom_call.1} parent=11 // pred_check_branch
          %334 = sbr.rel (%p332) target = $region36
        $region35: #{tpu_custom_call.1} parent=11 // pred_region
          _
        $region36: #{tpu_custom_call.1} parent=11 // pred_fallthru
          _
        // Predicated region
        $region37: #{tpu_custom_call.1} parent=11 // pred_check
          %p335 = pneg %p225
        $region38: #{tpu_custom_call.1} parent=11 // pred_check_branch
          %337 = sbr.rel (%p335) target = $region40
        $region39: #{tpu_custom_call.1} parent=11 // pred_region
          _
        $region40: #{tpu_custom_call.1} parent=11 // pred_fallthru
          _
        // Predicated region
        $region41: #{tpu_custom_call.1} parent=11 // pred_check
          %p338 = pneg %p246
        $region42: #{tpu_custom_call.1} parent=11 // pred_check_branch
          %340 = sbr.rel (%p338) target = $region44
        $region43: #{tpu_custom_call.1} parent=11 // pred_region
          _
        $region44: #{tpu_custom_call.1} parent=11 // pred_fallthru
          _
      $region12: #{tpu_custom_call.1} parent=5 // pred_fallthru
        _
      %p341 = scmp.lt.s32.totalorder %s26, 2
      // Predicated region
      $region45: #{tpu_custom_call.1} parent=5 // pred_check
        %p342 = pneg %p341
      $region46: #{tpu_custom_call.1} parent=5 // pred_check_branch
        %344 = sbr.rel (%p342) target = $region48
      $region47: #{tpu_custom_call.1} parent=5 // pred_region
        // Predicated region
        $region49: #{tpu_custom_call.1} parent=47 // pred_check
          %p345 = pneg %p46
        $region50: #{tpu_custom_call.1} parent=47 // pred_check_branch
          %347 = sbr.rel (%p345) target = $region52
        $region51: #{tpu_custom_call.1} parent=47 // pred_region
          %s348 = sand.u32 %s36, 1
          %s349 = scalar_lea.sflag [#allocation4], %s348
          %s350 = sand.u32 %s36, 1
          %s351 = smul.addr %s350, 8
          %s352 = scalar_lea.vmem [#allocation3], %s351
          %s354 = ssub.s32 128, 128
          %355 = vsyncadd %s349, %s354
          %s356 = smul.addr %s26, 128
          %s357 = scalar_lea.hbm %s0, %s356
          %s359 = sshll.u32 %s352, 4
          %s360 = int_to_ptr.vmem [resolvable:$true] %s359
          %362 = dma.hbm_to_vmem [thread:$0]  %s357, 128, %s360, %s349
        $region52: #{tpu_custom_call.1} parent=47 // pred_fallthru
          _
        // Predicated region
        $region53: #{tpu_custom_call.1} parent=47 // pred_check
          %p363 = pneg %p72
        $region54: #{tpu_custom_call.1} parent=47 // pred_check_branch
          %365 = sbr.rel (%p363) target = $region56
        $region55: #{tpu_custom_call.1} parent=47 // pred_region
          %s366 = sand.u32 %s26, 1
          %s367 = scalar_lea.sflag [#allocation7], %s366
          %s368 = sand.u32 %s62, 1
          %s369 = smul.addr %s368, 16
          %s370 = scalar_lea.vmem [#allocation6], %s369
          %s372 = ssub.s32 256, 256
          %373 = vsyncadd %s367, %s372
          %s374 = smul.addr %s26, 2
          %s375 = smul.addr %s374, 128
          %s376 = scalar_lea.hbm %s1, %s375
          %s377 = sshll.u32 %s370, 4
          %s378 = int_to_ptr.vmem [resolvable:$true] %s377
          %383 = dma.hbm_to_vmem [thread:$0]  %s376, 256, %s378, %s367, 128, 128, 8
        $region56: #{tpu_custom_call.1} parent=47 // pred_fallthru
          _
      $region48: #{tpu_custom_call.1} parent=5 // pred_fallthru
        _
      %p384 = scmp.le.s32.totalorder 1, %s26
      %p385 = scmp.lt.s32.totalorder %s26, 3
      %p386 = pnand %p384, %p385
      %p387 = pneg %p386
      // Predicated region
      $region57: #{tpu_custom_call.1} parent=5 // pred_check
        _
      $region58: #{tpu_custom_call.1} parent=5 // pred_check_branch
        %389 = sbr.rel (%p386) target = $region60
      $region59: #{tpu_custom_call.1} parent=5 // pred_region
        %s390 = ssub.s32 %s26, 1
        %s391 = sand.u32 %s39, 1
        %s392 = scalar_lea.sflag [#allocation4], %s391
        %s393 = sand.u32 %s39, 1
        %s394 = smul.addr %s393, 8
        %s395 = scalar_lea.vmem [#allocation3], %s394
        // Predicated region
        $region61: #{tpu_custom_call.1} parent=59 // pred_check
          %p396 = pneg %p52
        $region62: #{tpu_custom_call.1} parent=59 // pred_check_branch
          %398 = sbr.rel (%p396) target = $region64
        $region63: #{tpu_custom_call.1} parent=59 // pred_region
          %399 = dma.done %s392, 128
        $region64: #{tpu_custom_call.1} parent=59 // pred_fallthru
          _
        %s400 = sand.u32 %s31, 1
        %s401 = scalar_lea.sflag [#allocation7], %s400
        %s402 = sand.u32 %s65, 1
        %s403 = smul.addr %s402, 16
        %s404 = scalar_lea.vmem [#allocation6], %s403
        // Predicated region
        $region65: #{tpu_custom_call.1} parent=59 // pred_check
          %p405 = pneg %p78
        $region66: #{tpu_custom_call.1} parent=59 // pred_check_branch
          %407 = sbr.rel (%p405) target = $region68
        $region67: #{tpu_custom_call.1} parent=59 // pred_region
          %408 = dma.done %s401, 256
        $region68: #{tpu_custom_call.1} parent=59 // pred_fallthru
          _
        // Predicated region
        $region69: #{tpu_custom_call.1} parent=59 // pred_check
          %p409 = pneg %p99
        $region70: #{tpu_custom_call.1} parent=59 // pred_check_branch
          %411 = sbr.rel (%p409) target = $region72
        $region71: #{tpu_custom_call.1} parent=59 // pred_region
          %412 = dma.done [#allocation7], 512
        $region72: #{tpu_custom_call.1} parent=59 // pred_fallthru
          _
        // Predicated region
        $region73: #{tpu_custom_call.1} parent=59 // pred_check
          %p413 = pneg %p141
        $region74: #{tpu_custom_call.1} parent=59 // pred_check_branch
          %415 = sbr.rel (%p413) target = $region76
        $region75: #{tpu_custom_call.1} parent=59 // pred_region
          %416 = dma.done [#allocation10], 512
        $region76: #{tpu_custom_call.1} parent=59 // pred_fallthru
          _
        // Predicated region
        $region77: #{tpu_custom_call.1} parent=59 // pred_check
          %p417 = pneg %p183
        $region78: #{tpu_custom_call.1} parent=59 // pred_check_branch
          %419 = sbr.rel (%p417) target = $region80
        $region79: #{tpu_custom_call.1} parent=59 // pred_region
          %420 = dma.done [#allocation10], 512
        $region80: #{tpu_custom_call.1} parent=59 // pred_fallthru
          _
        %s421 = sand.u32 %s39, 1
        %s422 = scalar_lea.sflag [#allocation4], %s421
        %s423 = sand.u32 %s39, 1
        %s424 = smul.addr %s423, 8
        %s425 = scalar_lea.vmem [#allocation3], %s424
        %p426 = pneg %p52
        %p427 = pneg %p49
        %s428 = sand.u32 %s31, 1
        %s429 = scalar_lea.sflag [#allocation7], %s428
        %s430 = sand.u32 %s65, 1
        %s431 = smul.addr %s430, 16
        %s432 = scalar_lea.vmem [#allocation6], %s431
        %p433 = pneg %p78
        %p434 = pneg %p75
        %p435 = pneg %p99
        %p436 = pneg %p96
        %p437 = pneg %p120
        %p438 = pneg %p117
        %p439 = pneg %p141
        %p440 = pneg %p138
        %p441 = pneg %p162
        %p442 = pneg %p159
        %p443 = pneg %p183
        %p444 = pneg %p180
        %p445 = pneg %p204
        %p446 = pneg %p201
        %p447 = pneg %p225
        %p448 = pneg %p222
        %p449 = pneg %p246
        %p450 = pneg %p243
        %p451 = pneg %p272
        %p452 = pneg %p269
        %s453 = sand.u32 %s259, 1
        %s454 = scalar_lea.sflag [#allocation5], %s453
        %s455 = sand.u32 %s259, 1
        %s456 = smul.addr %s455, 8
        %s457 = scalar_lea.vmem [#allocation12], %s456
        %v458 = vld [vmem:[%s395] sm:$0xff]
        %v459 = vld [vmem:[%s404] sm:$0xff]
        %v460 = vld [vmem:[%s404 + $0x8] sm:$0xff]
        %v461 = vld [vmem:[#allocation8] sm:$0xff]
        %v462 = vld [vmem:[#allocation8 + $0x8] sm:$0xff]
        %v463 = vld [vmem:[#allocation8 + $0x10] sm:$0xff]
        %v464 = vld [vmem:[#allocation8 + $0x18] sm:$0xff]
        %v465 = vld [vmem:[%s3] sm:$0x1]
        %v467 = vlaneseq
        %v468 = vshrl.u32 %v467, 7
        %v469 = vsub.s32 0, %v468
        %v470 = vrot.slane %v465, %v469
        %vm472 = vcmask 261120
        %v474 = vsel %vm472, %v458, 0
        %476 = vmatprep.subr.mxu0 0.0
        %477 = vmatpush1.msra.mxu0 0.0
        %478 = vmatprep.subr.mxu0 0.0
        %479 = vmatpush1.msra.mxu0 0.0
        %480 = vmatprep.subr.mxu0 0.0
        %481 = vmatpush1.msra.mxu0 0.0
        %482 = vmatprep.subr.mxu0 0.0
        %483 = vmatpush1.msra.mxu0 0.0
        %484 = vmatprep.subr.mxu0 0.0
        %485 = vmatpush1.msra.mxu0 0.0
        %486 = vmatprep.subr.mxu0 0.0
        %487 = vmatpush1.msra.mxu0 0.0
        %488 = vmatprep.subr.mxu0 0.0
        %489 = vmatpush1.msra.mxu0 0.0
        %490 = vmatprep.subr.mxu0 0.0
        %491 = vmatpush1.msra.mxu0 0.0
        %492 = vmatprep.subr.mxu0 0.0
        %493 = vmatpush1.msra.mxu0 0.0
        %494 = vmatprep.subr.mxu0 0.0
        %495 = vmatpush1.msra.mxu0 0.0
        %496 = vmatprep.subr.mxu0 0.0
        %497 = vmatpush1.msra.mxu0 0.0
        %498 = vmatprep.subr.mxu0 0.0
        %499 = vmatpush1.msra.mxu0 0.0
        %500 = vmatprep.subr.mxu0 0.0
        %501 = vmatpush1.msra.mxu0 %v464
        %502 = vmatprep.subr.mxu0 0.0
        %503 = vmatpush1.msra.mxu0 %v463
        %504 = vmatprep.subr.mxu0 0.0
        %505 = vmatpush1.msra.mxu0 %v462
        %506 = vmatprep.subr.mxu0 0.0
        %507 = vmatpush1.msra.mxu0 %v461
        %508 = vmatprep.subr.mxu0 0.0
        %509 = vmatpush2.msra.mxu0 0.0
        %510 = vmatprep.subr.mxu0 0.0
        %511 = vmatpush2.msra.mxu0 0.0
        %512 = vmatprep.subr.mxu0 0.0
        %513 = vmatpush2.msra.mxu0 0.0
        %514 = vmatprep.subr.mxu0 0.0
        %515 = vmatpush2.msra.mxu0 0.0
        %516 = vmatprep.subr.mxu0 0.0
        %517 = vmatpush2.msra.mxu0 0.0
        %518 = vmatprep.subr.mxu0 0.0
        %519 = vmatpush2.msra.mxu0 0.0
        %520 = vmatprep.subr.mxu0 0.0
        %521 = vmatpush2.msra.mxu0 0.0
        %522 = vmatprep.subr.mxu0 0.0
        %523 = vmatpush2.msra.mxu0 0.0
        %524 = vmatprep.subr.mxu0 0.0
        %525 = vmatpush2.msra.mxu0 0.0
        %526 = vmatprep.subr.mxu0 0.0
        %527 = vmatpush2.msra.mxu0 0.0
        %528 = vmatprep.subr.mxu0 0.0
        %529 = vmatpush2.msra.mxu0 0.0
        %530 = vmatprep.subr.mxu0 0.0
        %531 = vmatpush2.msra.mxu0 0.0
        %532 = vmatprep.subr.mxu0 0.0
        %533 = vmatpush2.msra.mxu0 0.0
        %534 = vmatprep.subr.mxu0 0.0
        %535 = vmatpush2.msra.mxu0 0.0
        %536 = vmatprep.subr.mxu0 0.0
        %537 = vmatpush2.msra.mxu0 0.0
        %538 = vmatprep.subr.mxu0 0.0
        %539 = vmatpush2.msra.mxu0 0.0
        %540 = vmatprep.mubr.f32.mxu0 0.0
        %541 = vmatmul.mubr.f32.gmra.mxu0 %v474
        %v542 = vpop.f32.mrf.mxu0
        %v543 = vadd.f32 %v470, %v542
        %v544 = vpop.f32.mrf.mxu0
        %545 = vdwg.mxu0
        %v546 = vmul.f32 %v543, 0.17677669
        %v547 = vld [vmem:[#allocation9] sm:$0xff]
        %v548 = vld [vmem:[#allocation9 + $0x8] sm:$0xff]
        %v549 = vld [vmem:[#allocation9 + $0x10] sm:$0xff]
        %v550 = vld [vmem:[#allocation9 + $0x18] sm:$0xff]
        %v551 = vld [vmem:[%s5] sm:$0x1]
        %v553 = vlaneseq
        %v554 = vshrl.u32 %v553, 7
        %v555 = vsub.s32 0, %v554
        %v556 = vrot.slane %v551, %v555
        %v559 = vsel %vm472, %v459, 0
        %v562 = vsel %vm472, %v460, 0
        %564 = vmatprep.subr.mxu0 0.0
        %565 = vmatpush1.msra.mxu0 0.0
        %566 = vmatprep.subr.mxu0 0.0
        %567 = vmatpush1.msra.mxu0 0.0
        %568 = vmatprep.subr.mxu0 0.0
        %569 = vmatpush1.msra.mxu0 0.0
        %570 = vmatprep.subr.mxu0 0.0
        %571 = vmatpush1.msra.mxu0 0.0
        %572 = vmatprep.subr.mxu0 0.0
        %573 = vmatpush1.msra.mxu0 0.0
        %574 = vmatprep.subr.mxu0 0.0
        %575 = vmatpush1.msra.mxu0 0.0
        %576 = vmatprep.subr.mxu0 0.0
        %577 = vmatpush1.msra.mxu0 0.0
        %578 = vmatprep.subr.mxu0 0.0
        %579 = vmatpush1.msra.mxu0 0.0
        %580 = vmatprep.subr.mxu0 0.0
        %581 = vmatpush1.msra.mxu0 0.0
        %582 = vmatprep.subr.mxu0 0.0
        %583 = vmatpush1.msra.mxu0 0.0
        %584 = vmatprep.subr.mxu0 0.0
        %585 = vmatpush1.msra.mxu0 0.0
        %586 = vmatprep.subr.mxu0 0.0
        %587 = vmatpush1.msra.mxu0 0.0
        %588 = vmatprep.subr.mxu0 0.0
        %589 = vmatpush1.msra.mxu0 %v550
        %590 = vmatprep.subr.mxu0 0.0
        %591 = vmatpush1.msra.mxu0 %v549
        %592 = vmatprep.subr.mxu0 0.0
        %593 = vmatpush1.msra.mxu0 %v548
        %594 = vmatprep.subr.mxu0 0.0
        %595 = vmatpush1.msra.mxu0 %v547
        %596 = vmatprep.subr.mxu0 0.0
        %597 = vmatpush2.msra.mxu0 0.0
        %598 = vmatprep.subr.mxu0 0.0
        %599 = vmatpush2.msra.mxu0 0.0
        %600 = vmatprep.subr.mxu0 0.0
        %601 = vmatpush2.msra.mxu0 0.0
        %602 = vmatprep.subr.mxu0 0.0
        %603 = vmatpush2.msra.mxu0 0.0
        %604 = vmatprep.subr.mxu0 0.0
        %605 = vmatpush2.msra.mxu0 0.0
        %606 = vmatprep.subr.mxu0 0.0
        %607 = vmatpush2.msra.mxu0 0.0
        %608 = vmatprep.subr.mxu0 0.0
        %609 = vmatpush2.msra.mxu0 0.0
        %610 = vmatprep.subr.mxu0 0.0
        %611 = vmatpush2.msra.mxu0 0.0
        %612 = vmatprep.subr.mxu0 0.0
        %613 = vmatpush2.msra.mxu0 0.0
        %614 = vmatprep.subr.mxu0 0.0
        %615 = vmatpush2.msra.mxu0 0.0
        %616 = vmatprep.subr.mxu0 0.0
        %617 = vmatpush2.msra.mxu0 0.0
        %618 = vmatprep.subr.mxu0 0.0
        %619 = vmatpush2.msra.mxu0 0.0
        %620 = vmatprep.subr.mxu0 0.0
        %621 = vmatpush2.msra.mxu0 0.0
        %622 = vmatprep.subr.mxu0 0.0
        %623 = vmatpush2.msra.mxu0 0.0
        %624 = vmatprep.subr.mxu0 0.0
        %625 = vmatpush2.msra.mxu0 0.0
        %626 = vmatprep.subr.mxu0 0.0
        %627 = vmatpush2.msra.mxu0 0.0
        %628 = vmatprep.mubr.f32.mxu0 0.0
        %629 = vmatmul.mubr.f32.gmra.mxu0 %v559
        %v630 = vpop.f32.mrf.mxu0
        %v631 = vadd.f32 %v556, %v630
        %v632 = vpop.f32.mrf.mxu0
        %633 = vmatprep.mubr.f32.mxu0 0.0
        %634 = vmatmul.mubr.f32.gmra.mxu0 %v562
        %v635 = vpop.f32.mrf.mxu0
        %v636 = vadd.f32 %v556, %v635
        %v637 = vpop.f32.mrf.mxu0
        %638 = vdwg.mxu0
        %vm639 = vcmask 64512
        %v641 = vsel %vm639, %v546, 0
        %v644 = vsel %vm639, %v631, 0
        %v647 = vsel %vm639, %v636, 0
        %649 = vmatprep.subr.mxu0 0.0
        %650 = vmatpush1.xpose.msra.mxu0 0.0
        %651 = vmatprep.subr.mxu0 0.0
        %652 = vmatpush1.xpose.msra.mxu0 0.0
        %653 = vmatprep.subr.mxu0 0.0
        %654 = vmatpush1.xpose.msra.mxu0 0.0
        %655 = vmatprep.subr.mxu0 0.0
        %656 = vmatpush1.xpose.msra.mxu0 0.0
        %657 = vmatprep.subr.mxu0 0.0
        %658 = vmatpush1.xpose.msra.mxu0 0.0
        %659 = vmatprep.subr.mxu0 0.0
        %660 = vmatpush1.xpose.msra.mxu0 0.0
        %661 = vmatprep.subr.mxu0 0.0
        %662 = vmatpush1.xpose.msra.mxu0 0.0
        %663 = vmatprep.subr.mxu0 0.0
        %664 = vmatpush1.xpose.msra.mxu0 0.0
        %665 = vmatprep.subr.mxu0 0.0
        %666 = vmatpush1.xpose.msra.mxu0 0.0
        %667 = vmatprep.subr.mxu0 0.0
        %668 = vmatpush1.xpose.msra.mxu0 0.0
        %669 = vmatprep.subr.mxu0 0.0
        %670 = vmatpush1.xpose.msra.mxu0 0.0
        %671 = vmatprep.subr.mxu0 0.0
        %672 = vmatpush1.xpose.msra.mxu0 0.0
        %673 = vmatprep.subr.mxu0 0.0
        %674 = vmatpush1.xpose.msra.mxu0 0.0
        %675 = vmatprep.subr.mxu0 0.0
        %676 = vmatpush1.xpose.msra.mxu0 0.0
        %677 = vmatprep.subr.mxu0 0.0
        %678 = vmatpush1.xpose.msra.mxu0 %v647
        %679 = vmatprep.subr.mxu0 0.0
        %680 = vmatpush1.xpose.msra.mxu0 %v644
        %681 = vmatprep.subr.mxu0 0.0
        %682 = vmatpush2.xpose.msra.mxu0 0.0
        %683 = vmatprep.subr.mxu0 0.0
        %684 = vmatpush2.xpose.msra.mxu0 0.0
        %685 = vmatprep.subr.mxu0 0.0
        %686 = vmatpush2.xpose.msra.mxu0 0.0
        %687 = vmatprep.subr.mxu0 0.0
        %688 = vmatpush2.xpose.msra.mxu0 0.0
        %689 = vmatprep.subr.mxu0 0.0
        %690 = vmatpush2.xpose.msra.mxu0 0.0
        %691 = vmatprep.subr.mxu0 0.0
        %692 = vmatpush2.xpose.msra.mxu0 0.0
        %693 = vmatprep.subr.mxu0 0.0
        %694 = vmatpush2.xpose.msra.mxu0 0.0
        %695 = vmatprep.subr.mxu0 0.0
        %696 = vmatpush2.xpose.msra.mxu0 0.0
        %697 = vmatprep.subr.mxu0 0.0
        %698 = vmatpush2.xpose.msra.mxu0 0.0
        %699 = vmatprep.subr.mxu0 0.0
        %700 = vmatpush2.xpose.msra.mxu0 0.0
        %701 = vmatprep.subr.mxu0 0.0
        %702 = vmatpush2.xpose.msra.mxu0 0.0
        %703 = vmatprep.subr.mxu0 0.0
        %704 = vmatpush2.xpose.msra.mxu0 0.0
        %705 = vmatprep.subr.mxu0 0.0
        %706 = vmatpush2.xpose.msra.mxu0 0.0
        %707 = vmatprep.subr.mxu0 0.0
        %708 = vmatpush2.xpose.msra.mxu0 0.0
        %709 = vmatprep.subr.mxu0 0.0
        %710 = vmatpush2.xpose.msra.mxu0 0.0
        %711 = vmatprep.subr.mxu0 0.0
        %712 = vmatpush2.xpose.msra.mxu0 0.0
        %713 = vmatprep.mubr.f32.mxu0 0.0
        %714 = vmatmul.mubr.f32.gmra.mxu0 %v641
        %v715 = vpop.f32.mrf.mxu0
        %v716 = vadd.f32 0.0, %v715
        %v717 = vpop.f32.mrf.mxu0
        %718 = vdwg.mxu0
        %vm719 = vcmask 130048
        %v720 = vsel %vm719, %v716, -inf
        %721 = vmax.xlane.f32.xlu0 %v720
        %v722 = vpop.xlane.xlu0 %721
        %v723 = vsub.f32 %v716, %v722
        %v724 = vmul.f32 %v723, 1.442695
        %v725 = vpow.pop %v724
        %v726 = vsel %vm719, %v725, 0.0
        %727 = vadd.xlane.f32.xlu0 %v726
        %v728 = vpop.xlane.xlu0 %727
        %v729 = vrcp.pop %v728
        %v730 = vmul.f32 %v725, %v729
        %731 = vrot.lane.b32.xlu0 %v631, 96
        %v732 = vpop.permute.xlu0 %731
        %733 = vrot.lane.b32.xlu0 %v636, 96
        %v734 = vpop.permute.xlu0 %733
        %v738 = vsel %vm719, %v730, 0
        %740 = vmatprep.subr.mxu0 0.0
        %741 = vmatpush1.msra.mxu0 0.0
        %742 = vmatprep.subr.mxu0 0.0
        %743 = vmatpush1.msra.mxu0 0.0
        %744 = vmatprep.subr.mxu0 0.0
        %745 = vmatpush1.msra.mxu0 0.0
        %746 = vmatprep.subr.mxu0 0.0
        %747 = vmatpush1.msra.mxu0 0.0
        %748 = vmatprep.subr.mxu0 0.0
        %749 = vmatpush1.msra.mxu0 0.0
        %750 = vmatprep.subr.mxu0 0.0
        %751 = vmatpush1.msra.mxu0 0.0
        %752 = vmatprep.subr.mxu0 0.0
        %753 = vmatpush1.msra.mxu0 0.0
        %754 = vmatprep.subr.mxu0 0.0
        %755 = vmatpush1.msra.mxu0 0.0
        %756 = vmatprep.subr.mxu0 0.0
        %757 = vmatpush1.msra.mxu0 0.0
        %758 = vmatprep.subr.mxu0 0.0
        %759 = vmatpush1.msra.mxu0 0.0
        %760 = vmatprep.subr.mxu0 0.0
        %761 = vmatpush1.msra.mxu0 0.0
        %762 = vmatprep.subr.mxu0 0.0
        %763 = vmatpush1.msra.mxu0 0.0
        %764 = vmatprep.subr.mxu0 0.0
        %765 = vmatpush1.msra.mxu0 0.0
        %766 = vmatprep.subr.mxu0 0.0
        %767 = vmatpush1.msra.mxu0 0.0
        %768 = vmatprep.subr.mxu0 0.0
        %769 = vmatpush1.msra.mxu0 %v734
        %770 = vmatprep.subr.mxu0 0.0
        %771 = vmatpush1.msra.mxu0 %v732
        %772 = vmatprep.subr.mxu0 0.0
        %773 = vmatpush2.msra.mxu0 0.0
        %774 = vmatprep.subr.mxu0 0.0
        %775 = vmatpush2.msra.mxu0 0.0
        %776 = vmatprep.subr.mxu0 0.0
        %777 = vmatpush2.msra.mxu0 0.0
        %778 = vmatprep.subr.mxu0 0.0
        %779 = vmatpush2.msra.mxu0 0.0
        %780 = vmatprep.subr.mxu0 0.0
        %781 = vmatpush2.msra.mxu0 0.0
        %782 = vmatprep.subr.mxu0 0.0
        %783 = vmatpush2.msra.mxu0 0.0
        %784 = vmatprep.subr.mxu0 0.0
        %785 = vmatpush2.msra.mxu0 0.0
        %786 = vmatprep.subr.mxu0 0.0
        %787 = vmatpush2.msra.mxu0 0.0
        %788 = vmatprep.subr.mxu0 0.0
        %789 = vmatpush2.msra.mxu0 0.0
        %790 = vmatprep.subr.mxu0 0.0
        %791 = vmatpush2.msra.mxu0 0.0
        %792 = vmatprep.subr.mxu0 0.0
        %793 = vmatpush2.msra.mxu0 0.0
        %794 = vmatprep.subr.mxu0 0.0
        %795 = vmatpush2.msra.mxu0 0.0
        %796 = vmatprep.subr.mxu0 0.0
        %797 = vmatpush2.msra.mxu0 0.0
        %798 = vmatprep.subr.mxu0 0.0
        %799 = vmatpush2.msra.mxu0 0.0
        %800 = vmatprep.subr.mxu0 0.0
        %801 = vmatpush2.msra.mxu0 0.0
        %802 = vmatprep.subr.mxu0 0.0
        %803 = vmatpush2.msra.mxu0 0.0
        %804 = vmatprep.mubr.f32.mxu0 0.0
        %805 = vmatmul.mubr.f32.gmra.mxu0 %v738
        %v806 = vpop.f32.mrf.mxu0
        %v807 = vadd.f32 0.0, %v806
        %v808 = vpop.f32.mrf.mxu0
        %809 = vdwg.mxu0
        %810 = vst.msk [vmem:[#allocation2] sm:$0xff] %vm639, %v807
        %811 = vrot.lane.b32.xlu0 %v546, 120
        %v812 = vpop.permute.xlu0 %811
        %813 = vrot.lane.b32.xlu0 %v631, 120
        %v814 = vpop.permute.xlu0 %813
        %815 = vrot.lane.b32.xlu0 %v636, 120
        %v816 = vpop.permute.xlu0 %815
        %v817 = vsel %vm639, %v812, 0
        %v819 = vsel %vm639, %v814, 0
        %v821 = vsel %vm639, %v816, 0
        %823 = vmatprep.subr.mxu0 0.0
        %824 = vmatpush1.xpose.msra.mxu0 0.0
        %825 = vmatprep.subr.mxu0 0.0
        %826 = vmatpush1.xpose.msra.mxu0 0.0
        %827 = vmatprep.subr.mxu0 0.0
        %828 = vmatpush1.xpose.msra.mxu0 0.0
        %829 = vmatprep.subr.mxu0 0.0
        %830 = vmatpush1.xpose.msra.mxu0 0.0
        %831 = vmatprep.subr.mxu0 0.0
        %832 = vmatpush1.xpose.msra.mxu0 0.0
        %833 = vmatprep.subr.mxu0 0.0
        %834 = vmatpush1.xpose.msra.mxu0 0.0
        %835 = vmatprep.subr.mxu0 0.0
        %836 = vmatpush1.xpose.msra.mxu0 0.0
        %837 = vmatprep.subr.mxu0 0.0
        %838 = vmatpush1.xpose.msra.mxu0 0.0
        %839 = vmatprep.subr.mxu0 0.0
        %840 = vmatpush1.xpose.msra.mxu0 0.0
        %841 = vmatprep.subr.mxu0 0.0
        %842 = vmatpush1.xpose.msra.mxu0 0.0
        %843 = vmatprep.subr.mxu0 0.0
        %844 = vmatpush1.xpose.msra.mxu0 0.0
        %845 = vmatprep.subr.mxu0 0.0
        %846 = vmatpush1.xpose.msra.mxu0 0.0
        %847 = vmatprep.subr.mxu0 0.0
        %848 = vmatpush1.xpose.msra.mxu0 0.0
        %849 = vmatprep.subr.mxu0 0.0
        %850 = vmatpush1.xpose.msra.mxu0 0.0
        %851 = vmatprep.subr.mxu0 0.0
        %852 = vmatpush1.xpose.msra.mxu0 %v821
        %853 = vmatprep.subr.mxu0 0.0
        %854 = vmatpush1.xpose.msra.mxu0 %v819
        %855 = vmatprep.subr.mxu0 0.0
        %856 = vmatpush2.xpose.msra.mxu0 0.0
        %857 = vmatprep.subr.mxu0 0.0
        %858 = vmatpush2.xpose.msra.mxu0 0.0
        %859 = vmatprep.subr.mxu0 0.0
        %860 = vmatpush2.xpose.msra.mxu0 0.0
        %861 = vmatprep.subr.mxu0 0.0
        %862 = vmatpush2.xpose.msra.mxu0 0.0
        %863 = vmatprep.subr.mxu0 0.0
        %864 = vmatpush2.xpose.msra.mxu0 0.0
        %865 = vmatprep.subr.mxu0 0.0
        %866 = vmatpush2.xpose.msra.mxu0 0.0
        %867 = vmatprep.subr.mxu0 0.0
        %868 = vmatpush2.xpose.msra.mxu0 0.0
        %869 = vmatprep.subr.mxu0 0.0
        %870 = vmatpush2.xpose.msra.mxu0 0.0
        %871 = vmatprep.subr.mxu0 0.0
        %872 = vmatpush2.xpose.msra.mxu0 0.0
        %873 = vmatprep.subr.mxu0 0.0
        %874 = vmatpush2.xpose.msra.mxu0 0.0
        %875 = vmatprep.subr.mxu0 0.0
        %876 = vmatpush2.xpose.msra.mxu0 0.0
        %877 = vmatprep.subr.mxu0 0.0
        %878 = vmatpush2.xpose.msra.mxu0 0.0
        %879 = vmatprep.subr.mxu0 0.0
        %880 = vmatpush2.xpose.msra.mxu0 0.0
        %881 = vmatprep.subr.mxu0 0.0
        %882 = vmatpush2.xpose.msra.mxu0 0.0
        %883 = vmatprep.subr.mxu0 0.0
        %884 = vmatpush2.xpose.msra.mxu0 0.0
        %885 = vmatprep.subr.mxu0 0.0
        %886 = vmatpush2.xpose.msra.mxu0 0.0
        %887 = vmatprep.mubr.f32.mxu0 0.0
        %888 = vmatmul.mubr.f32.gmra.mxu0 %v817
        %v889 = vpop.f32.mrf.mxu0
        %v890 = vadd.f32 0.0, %v889
        %v891 = vpop.f32.mrf.mxu0
        %892 = vdwg.mxu0
        %v893 = vsel %vm719, %v890, -inf
        %894 = vmax.xlane.f32.xlu0 %v893
        %v895 = vpop.xlane.xlu0 %894
        %v896 = vsub.f32 %v890, %v895
        %v897 = vmul.f32 %v896, 1.442695
        %v898 = vpow.pop %v897
        %v899 = vsel %vm719, %v898, 0.0
        %900 = vadd.xlane.f32.xlu0 %v899
        %v901 = vpop.xlane.xlu0 %900
        %v902 = vrcp.pop %v901
        %v903 = vmul.f32 %v898, %v902
        %904 = vrot.lane.b32.xlu0 %v631, 88
        %v905 = vpop.permute.xlu0 %904
        %906 = vrot.lane.b32.xlu0 %v636, 88
        %v907 = vpop.permute.xlu0 %906
        %v911 = vsel %vm719, %v903, 0
        %913 = vmatprep.subr.mxu0 0.0
        %914 = vmatpush1.msra.mxu0 0.0
        %915 = vmatprep.subr.mxu0 0.0
        %916 = vmatpush1.msra.mxu0 0.0
        %917 = vmatprep.subr.mxu0 0.0
        %918 = vmatpush1.msra.mxu0 0.0
        %919 = vmatprep.subr.mxu0 0.0
        %920 = vmatpush1.msra.mxu0 0.0
        %921 = vmatprep.subr.mxu0 0.0
        %922 = vmatpush1.msra.mxu0 0.0
        %923 = vmatprep.subr.mxu0 0.0
        %924 = vmatpush1.msra.mxu0 0.0
        %925 = vmatprep.subr.mxu0 0.0
        %926 = vmatpush1.msra.mxu0 0.0
        %927 = vmatprep.subr.mxu0 0.0
        %928 = vmatpush1.msra.mxu0 0.0
        %929 = vmatprep.subr.mxu0 0.0
        %930 = vmatpush1.msra.mxu0 0.0
        %931 = vmatprep.subr.mxu0 0.0
        %932 = vmatpush1.msra.mxu0 0.0
        %933 = vmatprep.subr.mxu0 0.0
        %934 = vmatpush1.msra.mxu0 0.0
        %935 = vmatprep.subr.mxu0 0.0
        %936 = vmatpush1.msra.mxu0 0.0
        %937 = vmatprep.subr.mxu0 0.0
        %938 = vmatpush1.msra.mxu0 0.0
        %939 = vmatprep.subr.mxu0 0.0
        %940 = vmatpush1.msra.mxu0 0.0
        %941 = vmatprep.subr.mxu0 0.0
        %942 = vmatpush1.msra.mxu0 %v907
        %943 = vmatprep.subr.mxu0 0.0
        %944 = vmatpush1.msra.mxu0 %v905
        %945 = vmatprep.subr.mxu0 0.0
        %946 = vmatpush2.msra.mxu0 0.0
        %947 = vmatprep.subr.mxu0 0.0
        %948 = vmatpush2.msra.mxu0 0.0
        %949 = vmatprep.subr.mxu0 0.0
        %950 = vmatpush2.msra.mxu0 0.0
        %951 = vmatprep.subr.mxu0 0.0
        %952 = vmatpush2.msra.mxu0 0.0
        %953 = vmatprep.subr.mxu0 0.0
        %954 = vmatpush2.msra.mxu0 0.0
        %955 = vmatprep.subr.mxu0 0.0
        %956 = vmatpush2.msra.mxu0 0.0
        %957 = vmatprep.subr.mxu0 0.0
        %958 = vmatpush2.msra.mxu0 0.0
        %959 = vmatprep.subr.mxu0 0.0
        %960 = vmatpush2.msra.mxu0 0.0
        %961 = vmatprep.subr.mxu0 0.0
        %962 = vmatpush2.msra.mxu0 0.0
        %963 = vmatprep.subr.mxu0 0.0
        %964 = vmatpush2.msra.mxu0 0.0
        %965 = vmatprep.subr.mxu0 0.0
        %966 = vmatpush2.msra.mxu0 0.0
        %967 = vmatprep.subr.mxu0 0.0
        %968 = vmatpush2.msra.mxu0 0.0
        %969 = vmatprep.subr.mxu0 0.0
        %970 = vmatpush2.msra.mxu0 0.0
        %971 = vmatprep.subr.mxu0 0.0
        %972 = vmatpush2.msra.mxu0 0.0
        %973 = vmatprep.subr.mxu0 0.0
        %974 = vmatpush2.msra.mxu0 0.0
        %975 = vmatprep.subr.mxu0 0.0
        %976 = vmatpush2.msra.mxu0 0.0
        %977 = vmatprep.mubr.f32.mxu0 0.0
        %978 = vmatmul.mubr.f32.gmra.mxu0 %v911
        %v979 = vpop.f32.mrf.mxu0
        %v980 = vadd.f32 0.0, %v979
        %v981 = vpop.f32.mrf.mxu0
        %982 = vdwg.mxu0
        %984 = vrot.lane.b32.xlu0 %v980, 8
        %v985 = vpop.permute.xlu0 %984
        %vm987 = vcmask 130112
        %988 = vst.msk [vmem:[#allocation2] sm:$0xff] %vm987, %v985
        %989 = vrot.lane.b32.xlu0 %v546, 112
        %v990 = vpop.permute.xlu0 %989
        %991 = vrot.lane.b32.xlu0 %v631, 112
        %v992 = vpop.permute.xlu0 %991
        %993 = vrot.lane.b32.xlu0 %v636, 112
        %v994 = vpop.permute.xlu0 %993
        %v995 = vsel %vm639, %v990, 0
        %v997 = vsel %vm639, %v992, 0
        %v999 = vsel %vm639, %v994, 0
        %1001 = vmatprep.subr.mxu0 0.0
        %1002 = vmatpush1.xpose.msra.mxu0 0.0
        %1003 = vmatprep.subr.mxu0 0.0
        %1004 = vmatpush1.xpose.msra.mxu0 0.0
        %1005 = vmatprep.subr.mxu0 0.0
        %1006 = vmatpush1.xpose.msra.mxu0 0.0
        %1007 = vmatprep.subr.mxu0 0.0
        %1008 = vmatpush1.xpose.msra.mxu0 0.0
        %1009 = vmatprep.subr.mxu0 0.0
        %1010 = vmatpush1.xpose.msra.mxu0 0.0
        %1011 = vmatprep.subr.mxu0 0.0
        %1012 = vmatpush1.xpose.msra.mxu0 0.0
        %1013 = vmatprep.subr.mxu0 0.0
        %1014 = vmatpush1.xpose.msra.mxu0 0.0
        %1015 = vmatprep.subr.mxu0 0.0
        %1016 = vmatpush1.xpose.msra.mxu0 0.0
        %1017 = vmatprep.subr.mxu0 0.0
        %1018 = vmatpush1.xpose.msra.mxu0 0.0
        %1019 = vmatprep.subr.mxu0 0.0
        %1020 = vmatpush1.xpose.msra.mxu0 0.0
        %1021 = vmatprep.subr.mxu0 0.0
        %1022 = vmatpush1.xpose.msra.mxu0 0.0
        %1023 = vmatprep.subr.mxu0 0.0
        %1024 = vmatpush1.xpose.msra.mxu0 0.0
        %1025 = vmatprep.subr.mxu0 0.0
        %1026 = vmatpush1.xpose.msra.mxu0 0.0
        %1027 = vmatprep.subr.mxu0 0.0
        %1028 = vmatpush1.xpose.msra.mxu0 0.0
        %1029 = vmatprep.subr.mxu0 0.0
        %1030 = vmatpush1.xpose.msra.mxu0 %v999
        %1031 = vmatprep.subr.mxu0 0.0
        %1032 = vmatpush1.xpose.msra.mxu0 %v997
        %1033 = vmatprep.subr.mxu0 0.0
        %1034 = vmatpush2.xpose.msra.mxu0 0.0
        %1035 = vmatprep.subr.mxu0 0.0
        %1036 = vmatpush2.xpose.msra.mxu0 0.0
        %1037 = vmatprep.subr.mxu0 0.0
        %1038 = vmatpush2.xpose.msra.mxu0 0.0
        %1039 = vmatprep.subr.mxu0 0.0
        %1040 = vmatpush2.xpose.msra.mxu0 0.0
        %1041 = vmatprep.subr.mxu0 0.0
        %1042 = vmatpush2.xpose.msra.mxu0 0.0
        %1043 = vmatprep.subr.mxu0 0.0
        %1044 = vmatpush2.xpose.msra.mxu0 0.0
        %1045 = vmatprep.subr.mxu0 0.0
        %1046 = vmatpush2.xpose.msra.mxu0 0.0
        %1047 = vmatprep.subr.mxu0 0.0
        %1048 = vmatpush2.xpose.msra.mxu0 0.0
        %1049 = vmatprep.subr.mxu0 0.0
        %1050 = vmatpush2.xpose.msra.mxu0 0.0
        %1051 = vmatprep.subr.mxu0 0.0
        %1052 = vmatpush2.xpose.msra.mxu0 0.0
        %1053 = vmatprep.subr.mxu0 0.0
        %1054 = vmatpush2.xpose.msra.mxu0 0.0
        %1055 = vmatprep.subr.mxu0 0.0
        %1056 = vmatpush2.xpose.msra.mxu0 0.0
        %1057 = vmatprep.subr.mxu0 0.0
        %1058 = vmatpush2.xpose.msra.mxu0 0.0
        %1059 = vmatprep.subr.mxu0 0.0
        %1060 = vmatpush2.xpose.msra.mxu0 0.0
        %1061 = vmatprep.subr.mxu0 0.0
        %1062 = vmatpush2.xpose.msra.mxu0 0.0
        %1063 = vmatprep.subr.mxu0 0.0
        %1064 = vmatpush2.xpose.msra.mxu0 0.0
        %1065 = vmatprep.mubr.f32.mxu0 0.0
        %1066 = vmatmul.mubr.f32.gmra.mxu0 %v995
        %v1067 = vpop.f32.mrf.mxu0
        %v1068 = vadd.f32 0.0, %v1067
        %v1069 = vpop.f32.mrf.mxu0
        %1070 = vdwg.mxu0
        %v1071 = vsel %vm719, %v1068, -inf
        %1072 = vmax.xlane.f32.xlu0 %v1071
        %v1073 = vpop.xlane.xlu0 %1072
        %v1074 = vsub.f32 %v1068, %v1073
        %v1075 = vmul.f32 %v1074, 1.442695
        %v1076 = vpow.pop %v1075
        %v1077 = vsel %vm719, %v1076, 0.0
        %1078 = vadd.xlane.f32.xlu0 %v1077
        %v1079 = vpop.xlane.xlu0 %1078
        %v1080 = vrcp.pop %v1079
        %v1081 = vmul.f32 %v1076, %v1080
        %1082 = vrot.lane.b32.xlu0 %v631, 80
        %v1083 = vpop.permute.xlu0 %1082
        %1084 = vrot.lane.b32.xlu0 %v636, 80
        %v1085 = vpop.permute.xlu0 %1084
        %v1089 = vsel %vm719, %v1081, 0
        %1091 = vmatprep.subr.mxu0 0.0
        %1092 = vmatpush1.msra.mxu0 0.0
        %1093 = vmatprep.subr.mxu0 0.0
        %1094 = vmatpush1.msra.mxu0 0.0
        %1095 = vmatprep.subr.mxu0 0.0
        %1096 = vmatpush1.msra.mxu0 0.0
        %1097 = vmatprep.subr.mxu0 0.0
        %1098 = vmatpush1.msra.mxu0 0.0
        %1099 = vmatprep.subr.mxu0 0.0
        %1100 = vmatpush1.msra.mxu0 0.0
        %1101 = vmatprep.subr.mxu0 0.0
        %1102 = vmatpush1.msra.mxu0 0.0
        %1103 = vmatprep.subr.mxu0 0.0
        %1104 = vmatpush1.msra.mxu0 0.0
        %1105 = vmatprep.subr.mxu0 0.0
        %1106 = vmatpush1.msra.mxu0 0.0
        %1107 = vmatprep.subr.mxu0 0.0
        %1108 = vmatpush1.msra.mxu0 0.0
        %1109 = vmatprep.subr.mxu0 0.0
        %1110 = vmatpush1.msra.mxu0 0.0
        %1111 = vmatprep.subr.mxu0 0.0
        %1112 = vmatpush1.msra.mxu0 0.0
        %1113 = vmatprep.subr.mxu0 0.0
        %1114 = vmatpush1.msra.mxu0 0.0
        %1115 = vmatprep.subr.mxu0 0.0
        %1116 = vmatpush1.msra.mxu0 0.0
        %1117 = vmatprep.subr.mxu0 0.0
        %1118 = vmatpush1.msra.mxu0 0.0
        %1119 = vmatprep.subr.mxu0 0.0
        %1120 = vmatpush1.msra.mxu0 %v1085
        %1121 = vmatprep.subr.mxu0 0.0
        %1122 = vmatpush1.msra.mxu0 %v1083
        %1123 = vmatprep.subr.mxu0 0.0
        %1124 = vmatpush2.msra.mxu0 0.0
        %1125 = vmatprep.subr.mxu0 0.0
        %1126 = vmatpush2.msra.mxu0 0.0
        %1127 = vmatprep.subr.mxu0 0.0
        %1128 = vmatpush2.msra.mxu0 0.0
        %1129 = vmatprep.subr.mxu0 0.0
        %1130 = vmatpush2.msra.mxu0 0.0
        %1131 = vmatprep.subr.mxu0 0.0
        %1132 = vmatpush2.msra.mxu0 0.0
        %1133 = vmatprep.subr.mxu0 0.0
        %1134 = vmatpush2.msra.mxu0 0.0
        %1135 = vmatprep.subr.mxu0 0.0
        %1136 = vmatpush2.msra.mxu0 0.0
        %1137 = vmatprep.subr.mxu0 0.0
        %1138 = vmatpush2.msra.mxu0 0.0
        %1139 = vmatprep.subr.mxu0 0.0
        %1140 = vmatpush2.msra.mxu0 0.0
        %1141 = vmatprep.subr.mxu0 0.0
        %1142 = vmatpush2.msra.mxu0 0.0
        %1143 = vmatprep.subr.mxu0 0.0
        %1144 = vmatpush2.msra.mxu0 0.0
        %1145 = vmatprep.subr.mxu0 0.0
        %1146 = vmatpush2.msra.mxu0 0.0
        %1147 = vmatprep.subr.mxu0 0.0
        %1148 = vmatpush2.msra.mxu0 0.0
        %1149 = vmatprep.subr.mxu0 0.0
        %1150 = vmatpush2.msra.mxu0 0.0
        %1151 = vmatprep.subr.mxu0 0.0
        %1152 = vmatpush2.msra.mxu0 0.0
        %1153 = vmatprep.subr.mxu0 0.0
        %1154 = vmatpush2.msra.mxu0 0.0
        %1155 = vmatprep.mubr.f32.mxu0 0.0
        %1156 = vmatmul.mubr.f32.gmra.mxu0 %v1089
        %v1157 = vpop.f32.mrf.mxu0
        %v1158 = vadd.f32 0.0, %v1157
        %v1159 = vpop.f32.mrf.mxu0
        %1160 = vdwg.mxu0
        %1162 = vrot.lane.b32.xlu0 %v1158, 16
        %v1163 = vpop.permute.xlu0 %1162
        %vm1165 = vcmask 195712
        %1166 = vst.msk [vmem:[#allocation2] sm:$0xff] %vm1165, %v1163
        %1167 = vrot.lane.b32.xlu0 %v546, 104
        %v1168 = vpop.permute.xlu0 %1167
        %1169 = vrot.lane.b32.xlu0 %v631, 104
        %v1170 = vpop.permute.xlu0 %1169
        %1171 = vrot.lane.b32.xlu0 %v636, 104
        %v1172 = vpop.permute.xlu0 %1171
        %v1173 = vsel %vm639, %v1168, 0
        %v1175 = vsel %vm639, %v1170, 0
        %v1177 = vsel %vm639, %v1172, 0
        %1179 = vmatprep.subr.mxu0 0.0
        %1180 = vmatpush1.xpose.msra.mxu0 0.0
        %1181 = vmatprep.subr.mxu0 0.0
        %1182 = vmatpush1.xpose.msra.mxu0 0.0
        %1183 = vmatprep.subr.mxu0 0.0
        %1184 = vmatpush1.xpose.msra.mxu0 0.0
        %1185 = vmatprep.subr.mxu0 0.0
        %1186 = vmatpush1.xpose.msra.mxu0 0.0
        %1187 = vmatprep.subr.mxu0 0.0
        %1188 = vmatpush1.xpose.msra.mxu0 0.0
        %1189 = vmatprep.subr.mxu0 0.0
        %1190 = vmatpush1.xpose.msra.mxu0 0.0
        %1191 = vmatprep.subr.mxu0 0.0
        %1192 = vmatpush1.xpose.msra.mxu0 0.0
        %1193 = vmatprep.subr.mxu0 0.0
        %1194 = vmatpush1.xpose.msra.mxu0 0.0
        %1195 = vmatprep.subr.mxu0 0.0
        %1196 = vmatpush1.xpose.msra.mxu0 0.0
        %1197 = vmatprep.subr.mxu0 0.0
        %1198 = vmatpush1.xpose.msra.mxu0 0.0
        %1199 = vmatprep.subr.mxu0 0.0
        %1200 = vmatpush1.xpose.msra.mxu0 0.0
        %1201 = vmatprep.subr.mxu0 0.0
        %1202 = vmatpush1.xpose.msra.mxu0 0.0
        %1203 = vmatprep.subr.mxu0 0.0
        %1204 = vmatpush1.xpose.msra.mxu0 0.0
        %1205 = vmatprep.subr.mxu0 0.0
        %1206 = vmatpush1.xpose.msra.mxu0 0.0
        %1207 = vmatprep.subr.mxu0 0.0
        %1208 = vmatpush1.xpose.msra.mxu0 %v1177
        %1209 = vmatprep.subr.mxu0 0.0
        %1210 = vmatpush1.xpose.msra.mxu0 %v1175
        %1211 = vmatprep.subr.mxu0 0.0
        %1212 = vmatpush2.xpose.msra.mxu0 0.0
        %1213 = vmatprep.subr.mxu0 0.0
        %1214 = vmatpush2.xpose.msra.mxu0 0.0
        %1215 = vmatprep.subr.mxu0 0.0
        %1216 = vmatpush2.xpose.msra.mxu0 0.0
        %1217 = vmatprep.subr.mxu0 0.0
        %1218 = vmatpush2.xpose.msra.mxu0 0.0
        %1219 = vmatprep.subr.mxu0 0.0
        %1220 = vmatpush2.xpose.msra.mxu0 0.0
        %1221 = vmatprep.subr.mxu0 0.0
        %1222 = vmatpush2.xpose.msra.mxu0 0.0
        %1223 = vmatprep.subr.mxu0 0.0
        %1224 = vmatpush2.xpose.msra.mxu0 0.0
        %1225 = vmatprep.subr.mxu0 0.0
        %1226 = vmatpush2.xpose.msra.mxu0 0.0
        %1227 = vmatprep.subr.mxu0 0.0
        %1228 = vmatpush2.xpose.msra.mxu0 0.0
        %1229 = vmatprep.subr.mxu0 0.0
        %1230 = vmatpush2.xpose.msra.mxu0 0.0
        %1231 = vmatprep.subr.mxu0 0.0
        %1232 = vmatpush2.xpose.msra.mxu0 0.0
        %1233 = vmatprep.subr.mxu0 0.0
        %1234 = vmatpush2.xpose.msra.mxu0 0.0
        %1235 = vmatprep.subr.mxu0 0.0
        %1236 = vmatpush2.xpose.msra.mxu0 0.0
        %1237 = vmatprep.subr.mxu0 0.0
        %1238 = vmatpush2.xpose.msra.mxu0 0.0
        %1239 = vmatprep.subr.mxu0 0.0
        %1240 = vmatpush2.xpose.msra.mxu0 0.0
        %1241 = vmatprep.subr.mxu0 0.0
        %1242 = vmatpush2.xpose.msra.mxu0 0.0
        %1243 = vmatprep.mubr.f32.mxu0 0.0
        %1244 = vmatmul.mubr.f32.gmra.mxu0 %v1173
        %v1245 = vpop.f32.mrf.mxu0
        %v1246 = vadd.f32 0.0, %v1245
        %v1247 = vpop.f32.mrf.mxu0
        %1248 = vdwg.mxu0
        %v1249 = vsel %vm719, %v1246, -inf
        %1250 = vmax.xlane.f32.xlu0 %v1249
        %v1251 = vpop.xlane.xlu0 %1250
        %v1252 = vsub.f32 %v1246, %v1251
        %v1253 = vmul.f32 %v1252, 1.442695
        %v1254 = vpow.pop %v1253
        %v1255 = vsel %vm719, %v1254, 0.0
        %1256 = vadd.xlane.f32.xlu0 %v1255
        %v1257 = vpop.xlane.xlu0 %1256
        %v1258 = vrcp.pop %v1257
        %v1259 = vmul.f32 %v1254, %v1258
        %1260 = vrot.lane.b32.xlu0 %v631, 72
        %v1261 = vpop.permute.xlu0 %1260
        %1262 = vrot.lane.b32.xlu0 %v636, 72
        %v1263 = vpop.permute.xlu0 %1262
        %v1267 = vsel %vm719, %v1259, 0
        %1269 = vmatprep.subr.mxu0 0.0
        %1270 = vmatpush1.msra.mxu0 0.0
        %1271 = vmatprep.subr.mxu0 0.0
        %1272 = vmatpush1.msra.mxu0 0.0
        %1273 = vmatprep.subr.mxu0 0.0
        %1274 = vmatpush1.msra.mxu0 0.0
        %1275 = vmatprep.subr.mxu0 0.0
        %1276 = vmatpush1.msra.mxu0 0.0
        %1277 = vmatprep.subr.mxu0 0.0
        %1278 = vmatpush1.msra.mxu0 0.0
        %1279 = vmatprep.subr.mxu0 0.0
        %1280 = vmatpush1.msra.mxu0 0.0
        %1281 = vmatprep.subr.mxu0 0.0
        %1282 = vmatpush1.msra.mxu0 0.0
        %1283 = vmatprep.subr.mxu0 0.0
        %1284 = vmatpush1.msra.mxu0 0.0
        %1285 = vmatprep.subr.mxu0 0.0
        %1286 = vmatpush1.msra.mxu0 0.0
        %1287 = vmatprep.subr.mxu0 0.0
        %1288 = vmatpush1.msra.mxu0 0.0
        %1289 = vmatprep.subr.mxu0 0.0
        %1290 = vmatpush1.msra.mxu0 0.0
        %1291 = vmatprep.subr.mxu0 0.0
        %1292 = vmatpush1.msra.mxu0 0.0
        %1293 = vmatprep.subr.mxu0 0.0
        %1294 = vmatpush1.msra.mxu0 0.0
        %1295 = vmatprep.subr.mxu0 0.0
        %1296 = vmatpush1.msra.mxu0 0.0
        %1297 = vmatprep.subr.mxu0 0.0
        %1298 = vmatpush1.msra.mxu0 %v1263
        %1299 = vmatprep.subr.mxu0 0.0
        %1300 = vmatpush1.msra.mxu0 %v1261
        %1301 = vmatprep.subr.mxu0 0.0
        %1302 = vmatpush2.msra.mxu0 0.0
        %1303 = vmatprep.subr.mxu0 0.0
        %1304 = vmatpush2.msra.mxu0 0.0
        %1305 = vmatprep.subr.mxu0 0.0
        %1306 = vmatpush2.msra.mxu0 0.0
        %1307 = vmatprep.subr.mxu0 0.0
        %1308 = vmatpush2.msra.mxu0 0.0
        %1309 = vmatprep.subr.mxu0 0.0
        %1310 = vmatpush2.msra.mxu0 0.0
        %1311 = vmatprep.subr.mxu0 0.0
        %1312 = vmatpush2.msra.mxu0 0.0
        %1313 = vmatprep.subr.mxu0 0.0
        %1314 = vmatpush2.msra.mxu0 0.0
        %1315 = vmatprep.subr.mxu0 0.0
        %1316 = vmatpush2.msra.mxu0 0.0
        %1317 = vmatprep.subr.mxu0 0.0
        %1318 = vmatpush2.msra.mxu0 0.0
        %1319 = vmatprep.subr.mxu0 0.0
        %1320 = vmatpush2.msra.mxu0 0.0
        %1321 = vmatprep.subr.mxu0 0.0
        %1322 = vmatpush2.msra.mxu0 0.0
        %1323 = vmatprep.subr.mxu0 0.0
        %1324 = vmatpush2.msra.mxu0 0.0
        %1325 = vmatprep.subr.mxu0 0.0
        %1326 = vmatpush2.msra.mxu0 0.0
        %1327 = vmatprep.subr.mxu0 0.0
        %1328 = vmatpush2.msra.mxu0 0.0
        %1329 = vmatprep.subr.mxu0 0.0
        %1330 = vmatpush2.msra.mxu0 0.0
        %1331 = vmatprep.subr.mxu0 0.0
        %1332 = vmatpush2.msra.mxu0 0.0
        %1333 = vmatprep.mubr.f32.mxu0 0.0
        %1334 = vmatmul.mubr.f32.gmra.mxu0 %v1267
        %v1335 = vpop.f32.mrf.mxu0
        %v1336 = vadd.f32 0.0, %v1335
        %v1337 = vpop.f32.mrf.mxu0
        %1338 = vdwg.mxu0
        %1340 = vrot.lane.b32.xlu0 %v1336, 24
        %v1341 = vpop.permute.xlu0 %1340
        %vm1343 = vcmask 261312
        %1344 = vst.msk [vmem:[#allocation2] sm:$0xff] %vm1343, %v1341
        %v1345 = vld [vmem:[#allocation2] sm:$0xff]
        %v1346 = vld [vmem:[#allocation11] sm:$0xff]
        %v1347 = vld [vmem:[#allocation11 + $0x8] sm:$0xff]
        %v1348 = vld [vmem:[#allocation11 + $0x10] sm:$0xff]
        %v1349 = vld [vmem:[#allocation11 + $0x18] sm:$0xff]
        %v1350 = vld [vmem:[%s7] sm:$0x1]
        %v1352 = vlaneseq
        %v1353 = vshrl.u32 %v1352, 7
        %v1354 = vsub.s32 0, %v1353
        %v1355 = vrot.slane %v1350, %v1354
        %v1358 = vsel %vm472, %v1345, 0
        %1360 = vmatprep.subr.mxu0 0.0
        %1361 = vmatpush1.msra.mxu0 0.0
        %1362 = vmatprep.subr.mxu0 0.0
        %1363 = vmatpush1.msra.mxu0 0.0
        %1364 = vmatprep.subr.mxu0 0.0
        %1365 = vmatpush1.msra.mxu0 0.0
        %1366 = vmatprep.subr.mxu0 0.0
        %1367 = vmatpush1.msra.mxu0 0.0
        %1368 = vmatprep.subr.mxu0 0.0
        %1369 = vmatpush1.msra.mxu0 0.0
        %1370 = vmatprep.subr.mxu0 0.0
        %1371 = vmatpush1.msra.mxu0 0.0
        %1372 = vmatprep.subr.mxu0 0.0
        %1373 = vmatpush1.msra.mxu0 0.0
        %1374 = vmatprep.subr.mxu0 0.0
        %1375 = vmatpush1.msra.mxu0 0.0
        %1376 = vmatprep.subr.mxu0 0.0
        %1377 = vmatpush1.msra.mxu0 0.0
        %1378 = vmatprep.subr.mxu0 0.0
        %1379 = vmatpush1.msra.mxu0 0.0
        %1380 = vmatprep.subr.mxu0 0.0
        %1381 = vmatpush1.msra.mxu0 0.0
        %1382 = vmatprep.subr.mxu0 0.0
        %1383 = vmatpush1.msra.mxu0 0.0
        %1384 = vmatprep.subr.mxu0 0.0
        %1385 = vmatpush1.msra.mxu0 %v1349
        %1386 = vmatprep.subr.mxu0 0.0
        %1387 = vmatpush1.msra.mxu0 %v1348
        %1388 = vmatprep.subr.mxu0 0.0
        %1389 = vmatpush1.msra.mxu0 %v1347
        %1390 = vmatprep.subr.mxu0 0.0
        %1391 = vmatpush1.msra.mxu0 %v1346
        %1392 = vmatprep.subr.mxu0 0.0
        %1393 = vmatpush2.msra.mxu0 0.0
        %1394 = vmatprep.subr.mxu0 0.0
        %1395 = vmatpush2.msra.mxu0 0.0
        %1396 = vmatprep.subr.mxu0 0.0
        %1397 = vmatpush2.msra.mxu0 0.0
        %1398 = vmatprep.subr.mxu0 0.0
        %1399 = vmatpush2.msra.mxu0 0.0
        %1400 = vmatprep.subr.mxu0 0.0
        %1401 = vmatpush2.msra.mxu0 0.0
        %1402 = vmatprep.subr.mxu0 0.0
        %1403 = vmatpush2.msra.mxu0 0.0
        %1404 = vmatprep.subr.mxu0 0.0
        %1405 = vmatpush2.msra.mxu0 0.0
        %1406 = vmatprep.subr.mxu0 0.0
        %1407 = vmatpush2.msra.mxu0 0.0
        %1408 = vmatprep.subr.mxu0 0.0
        %1409 = vmatpush2.msra.mxu0 0.0
        %1410 = vmatprep.subr.mxu0 0.0
        %1411 = vmatpush2.msra.mxu0 0.0
        %1412 = vmatprep.subr.mxu0 0.0
        %1413 = vmatpush2.msra.mxu0 0.0
        %1414 = vmatprep.subr.mxu0 0.0
        %1415 = vmatpush2.msra.mxu0 0.0
        %1416 = vmatprep.subr.mxu0 0.0
        %1417 = vmatpush2.msra.mxu0 0.0
        %1418 = vmatprep.subr.mxu0 0.0
        %1419 = vmatpush2.msra.mxu0 0.0
        %1420 = vmatprep.subr.mxu0 0.0
        %1421 = vmatpush2.msra.mxu0 0.0
        %1422 = vmatprep.subr.mxu0 0.0
        %1423 = vmatpush2.msra.mxu0 0.0
        %1424 = vmatprep.mubr.f32.mxu0 0.0
        %1425 = vmatmul.mubr.f32.gmra.mxu0 %v1358
        %v1426 = vpop.f32.mrf.mxu0
        %v1427 = vadd.f32 %v1355, %v1426
        %v1428 = vpop.f32.mrf.mxu0
        %1429 = vdwg.mxu0
        %v1430 = vadd.f32 %v458, %v1427
        %v1431 = vsel %vm472, %v1430, 0.0
        %1432 = vadd.xlane.f32.xlu0 %v1431
        %v1433 = vpop.xlane.xlu0 %1432
        %v1434 = vrcp.pop 32.0
        %v1435 = vmul.f32 %v1433, %v1434
        %v1436 = vsub.f32 %v1430, %v1435
        %v1437 = vmul.f32 %v1436, %v1436
        %v1438 = vsel %vm472, %v1437, 0.0
        %1439 = vadd.xlane.f32.xlu0 %v1438
        %v1440 = vpop.xlane.xlu0 %1439
        %v1441 = vmul.f32 %v1440, %v1434
        %v1442 = vadd.f32 %v1441, 1e-05
        %v1443 = vrsqrt.pop %v1442
        %v1444 = vmul.f32 %v1436, %v1443
        %v1445 = vld [vmem:[%s8] sm:$0x1]
        %v1447 = vlaneseq
        %v1448 = vshrl.u32 %v1447, 7
        %v1449 = vsub.s32 0, %v1448
        %v1450 = vrot.slane %v1445, %v1449
        %v1452 = vmul.f32 %v1444, %v1450
        %v1453 = vld [vmem:[%s9] sm:$0x1]
        %v1455 = vlaneseq
        %v1456 = vshrl.u32 %v1455, 7
        %v1457 = vsub.s32 0, %v1456
        %v1458 = vrot.slane %v1453, %v1457
        %v1460 = vadd.f32 %v1452, %v1458
        %1461 = vst.msk [vmem:[%s457] sm:$0xff] %vm472, %v1460
        %s1462 = sand.u32 %s259, 1
        %s1463 = scalar_lea.sflag [#allocation5], %s1462
        %s1464 = sand.u32 %s259, 1
        %s1465 = smul.addr %s1464, 8
        %s1466 = scalar_lea.vmem [#allocation12], %s1465
        // Predicated region
        $region81: #{tpu_custom_call.1} parent=59 // pred_check
          %p1467 = pneg %p269
        $region82: #{tpu_custom_call.1} parent=59 // pred_check_branch
          %1469 = sbr.rel (%p1467) target = $region84
        $region83: #{tpu_custom_call.1} parent=59 // pred_region
          %s1471 = ssub.s32 128, 128
          %1472 = vsyncadd %s1463, %s1471
          %s1473 = smul.addr %s31, 128
          %s1474 = scalar_lea.hbm %s10, %s1473
          %s1476 = sshll.u32 %s1466, 4
          %s1477 = int_to_ptr.vmem [resolvable:$true] %s1476
          %1479 = dma.vmem_to_hbm [thread:$0]  %s1477, 128, %s1474, %s1463
        $region84: #{tpu_custom_call.1} parent=59 // pred_fallthru
          _
      $region60: #{tpu_custom_call.1} parent=5 // pred_fallthru
        _
      %p1480 = scmp.le.s32.totalorder 2, %s26
      // Predicated region
      $region85: #{tpu_custom_call.1} parent=5 // pred_check
        %p1481 = pneg %p1480
      $region86: #{tpu_custom_call.1} parent=5 // pred_check_branch
        %1483 = sbr.rel (%p1481) target = $region88
      $region87: #{tpu_custom_call.1} parent=5 // pred_region
        %s1484 = ssub.s32 %s26, 2
        // Predicated region
        $region89: #{tpu_custom_call.1} parent=87 // pred_check
          %p1485 = pneg %p275
        $region90: #{tpu_custom_call.1} parent=87 // pred_check_branch
          %1487 = sbr.rel (%p1485) target = $region92
        $region91: #{tpu_custom_call.1} parent=87 // pred_region
          %s1488 = sand.u32 %s260, 1
          %s1489 = scalar_lea.sflag [#allocation5], %s1488
          %s1490 = sand.u32 %s260, 1
          %s1491 = smul.addr %s1490, 8
          %s1492 = scalar_lea.vmem [#allocation12], %s1491
          %1493 = dma.done %s1489, 128
        $region92: #{tpu_custom_call.1} parent=87 // pred_fallthru
          _
      $region88: #{tpu_custom_call.1} parent=5 // pred_fallthru
        _
    $region6: #{tpu_custom_call.1} parent=1 // loop_footer
      %s30 = sadd.s32 1, %s26
    $region7: #{tpu_custom_call.1} parent=1 // loop_footer_branch
      %25 = sbr.rel target = $region3
    $region8: #{tpu_custom_call.1} parent=1 // loop_exit
      _
    %1494 = vsyncpa [#allocation4], 1
    %s1495 = scalar_lea.sflag [#allocation4], 1
    %1496 = vsyncpa %s1495, 1
    %1497 = vsyncpa [#allocation7], 1
    %s1498 = scalar_lea.sflag [#allocation7], 1
    %1499 = vsyncpa %s1498, 1
    %1500 = vsyncpa [#allocation10], 1
    %1501 = vsyncpa [#allocation5], 1
    %s1502 = scalar_lea.sflag [#allocation5], 1
    %1503 = vsyncpa %s1502, 1

</llo_original>
